<compile_context>
chip_gen: v5e
topology: v5e:2x2
jax: 0.10.0
libtpu: 0.0.40
codegen_flags: <defaults>
</compile_context>

<pallas_src>
import functools

import jax
import jax.numpy as jnp
from jax.experimental import pallas as pl
from jax.experimental.pallas import tpu as pltpu


# ----------------------------- in-kernel helpers ----------------------------

def _layernorm(x, g, b, eps=1e-5):
    mu = jnp.mean(x, axis=-1, keepdims=True)
    var = jnp.mean(jnp.square(x - mu), axis=-1, keepdims=True)
    return (x - mu) * jax.lax.rsqrt(var + eps) * g + b


# ------------------------------ fused kernel --------------------------------

def _encoder_kernel(x_ref, pw_ref, pb_ref, pos_ref,
                    ln1g_ref, ln1b_ref, wqkv_ref, wo_ref, bo_ref,
                    ln2g_ref, ln2b_ref, w1_ref, b1_ref, w2_ref, b2_ref,
                    hg_ref, hb_ref, hw_ref, hbias_ref,
                    o_ref, act_ref, *, heads, dim_head):
    """One grid step = one transformer layer for one batch row.

    grid = (B, depth); the activation stays resident in `act_ref` (VMEM)
    across the whole depth axis.
    """
    l = pl.program_id(1)
    hd = heads * dim_head

    # ---- patch_to_embedding + positional embedding (first layer step only) --
    @pl.when(l == 0)
    def _():
        act_ref[...] = (jnp.dot(x_ref[0], pw_ref[...],
                                preferred_element_type=jnp.float32)
                        + pb_ref[...] + pos_ref[0])

    x = act_ref[...]                                       # (N, dim)

    # ---- PreNorm multi-head attention + residual ----------------------------
    xn = _layernorm(x, ln1g_ref[0], ln1b_ref[0])
    # one wide QKV matmul (softmax scale pre-folded into the Q weights)
    qkv = jnp.dot(xn, wqkv_ref[0], preferred_element_type=jnp.float32)

    # TODO(synk): at large head counts switch this static unroll to
    # lax.fori_loop(..., unroll=True) to bound vreg live ranges.
    outs = []
    for h in range(heads):                                 # static unroll
        q = qkv[:, h * dim_head:(h + 1) * dim_head]
        k = qkv[:, hd + h * dim_head:hd + (h + 1) * dim_head]
        v = qkv[:, 2 * hd + h * dim_head:2 * hd + (h + 1) * dim_head]
        # q @ k^T without materializing an explicit transpose of k
        s = jax.lax.dot_general(q, k, (((1,), (1,)), ((), ())),
                                preferred_element_type=jnp.float32)
        s = s - jnp.max(s, axis=-1, keepdims=True)
        p = jnp.exp(s)
        p = p * pl.reciprocal(jnp.sum(p, axis=-1, keepdims=True), approx=True)
        outs.append(jnp.dot(p, v, preferred_element_type=jnp.float32))
    o_heads = jnp.concatenate(outs, axis=-1)               # (N, heads*dh)
    x = x + jnp.dot(o_heads, wo_ref[0],
                    preferred_element_type=jnp.float32) + bo_ref[0]

    # ---- PreNorm MLP(GELU) + residual ---------------------------------------
    xn2 = _layernorm(x, ln2g_ref[0], ln2b_ref[0])
    h1 = jnp.dot(xn2, w1_ref[0], preferred_element_type=jnp.float32) + b1_ref[0]
    # TODO(synk): PyTorch nn.GELU default is erf-exact; tanh approximation used here.
    h1 = jax.nn.gelu(h1, approximate=True)
    x = x + jnp.dot(h1, w2_ref[0], preferred_element_type=jnp.float32) + b2_ref[0]

    act_ref[...] = x

    # ---- mlp_head = LayerNorm + Linear(dim -> patch_dim) (last layer only) --
    @pl.when(l == pl.num_programs(1) - 1)
    def _():
        xn3 = _layernorm(x, hg_ref[...], hb_ref[...])
        o_ref[0] = jnp.dot(xn3, hw_ref[...],
                           preferred_element_type=jnp.float32) + hbias_ref[...]


# ------------------------------ kernel wrapper -------------------------------

def encoder_forward(img, params, *, patch_size, heads, dim_head, mask=None):
    # TODO(synk): mask semantics of EnTransformer are undefined in the
    # reference; only the default mask=None path of Encoder.forward is
    # implemented.
    B, C, H, W = img.shape
    p = patch_size
    hg, wg = H // p, W // p
    N = hg * wg
    P = p * p * C
    D = params["patch_w"].shape[1]
    depth = params["wqkv"].shape[0]
    hd = heads * dim_head
    mlp = params["w1"].shape[2]

    # rearrange: b c (h p1) (w p2) -> b (h w) (p1 p2 c)   (plain-JAX glue)
    x = img.reshape(B, C, hg, p, wg, p)
    x = x.transpose(0, 2, 4, 3, 5, 1).reshape(B, N, P)

    # BlockSpec helpers: per-batch row, constant slab, per-layer slab.
    def row(n, d):
        return pl.BlockSpec((1, n, d), lambda b, l: (b, 0, 0))

    def const(shape):
        nd = len(shape)
        return pl.BlockSpec(shape, lambda b, l, _nd=nd: (0,) * _nd)

    def per_layer(shape):
        nd = len(shape)
        return pl.BlockSpec((1,) + shape,
                            lambda b, l, _nd=nd: (l,) + (0,) * _nd)

    y = pl.pallas_call(
        functools.partial(_encoder_kernel, heads=heads, dim_head=dim_head),
        out_shape=jax.ShapeDtypeStruct((B, N, P), jnp.float32),
        grid=(B, depth),
        in_specs=[
            row(N, P),                                    # patch pixels
            const((P, D)), const((1, D)), const((1, N, D)),   # patch_w/b, pos
            per_layer((1, D)), per_layer((1, D)),         # ln1 g, b
            per_layer((D, 3 * hd)),                       # wqkv
            per_layer((hd, D)), per_layer((1, D)),        # wo, bo
            per_layer((1, D)), per_layer((1, D)),         # ln2 g, b
            per_layer((D, mlp)), per_layer((1, mlp)),     # w1, b1
            per_layer((mlp, D)), per_layer((1, D)),       # w2, b2
            const((1, D)), const((1, D)),                 # head LN g, b
            const((D, P)), const((1, P)),                 # head w, b
        ],
        out_specs=row(N, P),
        scratch_shapes=[pltpu.VMEM((N, D), jnp.float32)],  # resident activation
        compiler_params=pltpu.CompilerParams(
            dimension_semantics=("parallel", "arbitrary"),
            vmem_limit_bytes=32 * 1024 * 1024),
    )(x,
      params["patch_w"], params["patch_b"], params["pos_emb"][:, :N],
      params["ln1_g"], params["ln1_b"], params["wqkv"],
      params["wo"], params["bo"],
      params["ln2_g"], params["ln2_b"], params["w1"], params["b1"],
      params["w2"], params["b2"],
      params["head_ln_g"], params["head_ln_b"],
      params["head_w"], params["head_b"])

    # rearrange back: b (h w) (p1 p2 c) -> b c (h p1) (w p2)
    y = y.reshape(B, hg, wg, p, p, C)
    y = y.transpose(0, 5, 1, 3, 2, 4).reshape(B, C, H, W)
    return y


# ------------------------------- parameters ----------------------------------

def init_params(key, *, image_size, patch_size, dim, depth, heads, mlp_dim,
                channels, dim_head):
    num_patches = (image_size // patch_size) ** 2
    patch_dim = channels * patch_size ** 2
    hd = heads * dim_head
    keys = jax.random.split(key, 9)

    def w(k, shape):
        return jax.random.normal(k, shape, jnp.float32) * 0.02

    # softmax scale folded into the Q weights at init time
    wq = w(keys[2], (depth, dim, hd)) * (dim_head ** -0.5)
    wk = w(keys[3], (depth, dim, hd))
    wv = w(keys[4], (depth, dim, hd))

    return {
        "pos_emb": jax.random.normal(keys[0], (1, num_patches, dim),
                                     jnp.float32),
        "patch_w": w(keys[1], (patch_dim, dim)),
        "patch_b": jnp.zeros((1, dim), jnp.float32),
        # per-layer weights stacked along a leading depth axis
        "ln1_g": jnp.ones((depth, 1, dim), jnp.float32),
        "ln1_b": jnp.zeros((depth, 1, dim), jnp.float32),
        "wqkv": jnp.concatenate([wq, wk, wv], axis=-1),   # (depth, dim, 3*hd)
        "wo": w(keys[5], (depth, hd, dim)),
        "bo": jnp.zeros((depth, 1, dim), jnp.float32),
        "ln2_g": jnp.ones((depth, 1, dim), jnp.float32),
        "ln2_b": jnp.zeros((depth, 1, dim), jnp.float32),
        "w1": w(keys[6], (depth, dim, mlp_dim)),
        "b1": jnp.zeros((depth, 1, mlp_dim), jnp.float32),
        "w2": w(keys[7], (depth, mlp_dim, dim)),
        "b2": jnp.zeros((depth, 1, dim), jnp.float32),
        "head_ln_g": jnp.ones((1, dim), jnp.float32),
        "head_ln_b": jnp.zeros((1, dim), jnp.float32),
        "head_w": w(keys[8], (dim, patch_dim)),
        "head_b": jnp.zeros((1, patch_dim), jnp.float32),
    }


# ---------------------------------- main --------------------------------------

if __name__ == "__main__":
    image_size, patch_size = 16, 4
    dim, depth, heads, mlp_dim = 32, 2, 2, 64
    channels, dim_head = 3, 16

    key = jax.random.PRNGKey(0)
    kp, kx = jax.random.split(key)
    params = init_params(kp, image_size=image_size, patch_size=patch_size,
                         dim=dim, depth=depth, heads=heads, mlp_dim=mlp_dim,
                         channels=channels, dim_head=dim_head)
    img = jax.random.normal(kx, (2, channels, image_size, image_size),
                            jnp.float32)

    fwd = jax.jit(functools.partial(encoder_forward, patch_size=patch_size,
                                    heads=heads, dim_head=dim_head))
    out = fwd(img, params)
    jax.block_until_ready(out)
    assert out.shape == img.shape, (out.shape, img.shape)
    assert jnp.isfinite(out).all()
    print("KERNEL_OK")
</pallas_src>

<mosaic_0001>
module attributes {stable_mosaic.version = 11 : i64} {
  func.func @_encoder_kernel(%arg0: i32, %arg1: i32, %arg2: memref<1x16x48xf32, #tpu.memory_space<vmem>>, %arg3: memref<48x32xf32, #tpu.memory_space<vmem>>, %arg4: memref<1x32xf32, #tpu.memory_space<vmem>>, %arg5: memref<1x16x32xf32, #tpu.memory_space<vmem>>, %arg6: memref<1x1x32xf32, #tpu.memory_space<vmem>>, %arg7: memref<1x1x32xf32, #tpu.memory_space<vmem>>, %arg8: memref<1x32x96xf32, #tpu.memory_space<vmem>>, %arg9: memref<1x32x32xf32, #tpu.memory_space<vmem>>, %arg10: memref<1x1x32xf32, #tpu.memory_space<vmem>>, %arg11: memref<1x1x32xf32, #tpu.memory_space<vmem>>, %arg12: memref<1x1x32xf32, #tpu.memory_space<vmem>>, %arg13: memref<1x32x64xf32, #tpu.memory_space<vmem>>, %arg14: memref<1x1x64xf32, #tpu.memory_space<vmem>>, %arg15: memref<1x64x32xf32, #tpu.memory_space<vmem>>, %arg16: memref<1x1x32xf32, #tpu.memory_space<vmem>>, %arg17: memref<1x32xf32, #tpu.memory_space<vmem>>, %arg18: memref<1x32xf32, #tpu.memory_space<vmem>>, %arg19: memref<32x48xf32, #tpu.memory_space<vmem>>, %arg20: memref<1x48xf32, #tpu.memory_space<vmem>>, %arg21: memref<1x16x48xf32, #tpu.memory_space<vmem>>, %arg22: memref<16x32xf32, #tpu.memory_space<vmem>>) attributes {dimension_semantics = [#tpu.dimension_semantics<parallel>, #tpu.dimension_semantics<arbitrary>], iteration_bounds = array<i64: 2, 2>, scalar_prefetch = 0 : i64, scratch_operands = 1 : i64, tpu.core_type = #tpu.core_type<tc>, window_params = [{transform_indices = @transform_0, window_bounds = array<i64: 1, 16, 48>}, {pipeline_mode = #tpu.pipeline_mode<synchronous>, transform_indices = @transform_1, window_bounds = array<i64: 48, 32>}, {pipeline_mode = #tpu.pipeline_mode<synchronous>, transform_indices = @transform_2, window_bounds = array<i64: 1, 32>}, {pipeline_mode = #tpu.pipeline_mode<synchronous>, transform_indices = @transform_3, window_bounds = array<i64: 1, 16, 32>}, {transform_indices = @transform_4, window_bounds = array<i64: 1, 1, 32>}, {transform_indices = @transform_5, window_bounds = array<i64: 1, 1, 32>}, {transform_indices = @transform_6, window_bounds = array<i64: 1, 32, 96>}, {transform_indices = @transform_7, window_bounds = array<i64: 1, 32, 32>}, {transform_indices = @transform_8, window_bounds = array<i64: 1, 1, 32>}, {transform_indices = @transform_9, window_bounds = array<i64: 1, 1, 32>}, {transform_indices = @transform_10, window_bounds = array<i64: 1, 1, 32>}, {transform_indices = @transform_11, window_bounds = array<i64: 1, 32, 64>}, {transform_indices = @transform_12, window_bounds = array<i64: 1, 1, 64>}, {transform_indices = @transform_13, window_bounds = array<i64: 1, 64, 32>}, {transform_indices = @transform_14, window_bounds = array<i64: 1, 1, 32>}, {pipeline_mode = #tpu.pipeline_mode<synchronous>, transform_indices = @transform_15, window_bounds = array<i64: 1, 32>}, {pipeline_mode = #tpu.pipeline_mode<synchronous>, transform_indices = @transform_16, window_bounds = array<i64: 1, 32>}, {pipeline_mode = #tpu.pipeline_mode<synchronous>, transform_indices = @transform_17, window_bounds = array<i64: 32, 48>}, {pipeline_mode = #tpu.pipeline_mode<synchronous>, transform_indices = @transform_18, window_bounds = array<i64: 1, 48>}, {transform_indices = @transform_19, window_bounds = array<i64: 1, 16, 48>}]} {
    %c0_i32 = arith.constant 0 : i32
    %0 = arith.cmpi eq, %arg1, %c0_i32 : i32
    %1 = arith.extui %0 : i1 to i32
    %c0_i32_0 = arith.constant 0 : i32
    %2 = arith.cmpi ne, %1, %c0_i32_0 : i32
    scf.if %2 {
      %c0_63 = arith.constant 0 : index
      %c0_64 = arith.constant 0 : index
      %c0_65 = arith.constant 0 : index
      %130 = vector.load %arg2[%c0_63, %c0_64, %c0_65] : memref<1x16x48xf32, #tpu.memory_space<vmem>>, vector<1x16x48xf32>
      %131 = vector.shape_cast %130 : vector<1x16x48xf32> to vector<16x48xf32>
      %c0_66 = arith.constant 0 : index
      %c0_67 = arith.constant 0 : index
      %132 = vector.load %arg3[%c0_66, %c0_67] : memref<48x32xf32, #tpu.memory_space<vmem>>, vector<48x32xf32>
      %cst_68 = arith.constant dense<0.000000e+00> : vector<16x32xf32>
      %133 = tpu.matmul %131, %132, %cst_68 {dimension_numbers = #tpu.dot_dimension_numbers<[1], [0], [0], [1], [0, 0, 1, 1], [], []>} : vector<16x48xf32>, vector<48x32xf32>, vector<16x32xf32> -> vector<16x32xf32>
      %c0_69 = arith.constant 0 : index
      %c0_70 = arith.constant 0 : index
      %134 = vector.load %arg4[%c0_69, %c0_70] : memref<1x32xf32, #tpu.memory_space<vmem>>, vector<1x32xf32>
      %135 = vector.broadcast %134 : vector<1x32xf32> to vector<16x32xf32>
      %136 = arith.addf %133, %135 : vector<16x32xf32>
      %c0_71 = arith.constant 0 : index
      %c0_72 = arith.constant 0 : index
      %c0_73 = arith.constant 0 : index
      %137 = vector.load %arg5[%c0_71, %c0_72, %c0_73] : memref<1x16x32xf32, #tpu.memory_space<vmem>>, vector<1x16x32xf32>
      %138 = vector.shape_cast %137 : vector<1x16x32xf32> to vector<16x32xf32>
      %139 = arith.addf %136, %138 : vector<16x32xf32>
      %c0_74 = arith.constant 0 : index
      %c0_75 = arith.constant 0 : index
      %140 = vector.load %arg22[%c0_74, %c0_75] : memref<16x32xf32, #tpu.memory_space<vmem>>, vector<16x32xf32>
      tpu.vector_store %arg22[%c0_74, %c0_75], %139 {strides = array<i32>} : memref<16x32xf32, #tpu.memory_space<vmem>>, vector<16x32xf32>,
    } else {
    }
    %c0 = arith.constant 0 : index
    %c0_1 = arith.constant 0 : index
    %3 = vector.load %arg22[%c0, %c0_1] : memref<16x32xf32, #tpu.memory_space<vmem>>, vector<16x32xf32>
    %c0_2 = arith.constant 0 : index
    %c0_3 = arith.constant 0 : index
    %c0_4 = arith.constant 0 : index
    %4 = vector.load %arg6[%c0_2, %c0_3, %c0_4] : memref<1x1x32xf32, #tpu.memory_space<vmem>>, vector<1x1x32xf32>
    %5 = vector.shape_cast %4 : vector<1x1x32xf32> to vector<1x32xf32>
    %c0_5 = arith.constant 0 : index
    %c0_6 = arith.constant 0 : index
    %c0_7 = arith.constant 0 : index
    %6 = vector.load %arg7[%c0_5, %c0_6, %c0_7] : memref<1x1x32xf32, #tpu.memory_space<vmem>>, vector<1x1x32xf32>
    %7 = vector.shape_cast %6 : vector<1x1x32xf32> to vector<1x32xf32>
    %cst = arith.constant dense<0.000000e+00> : vector<16xf32>
    %8 = vector.multi_reduction <add>, %3, %cst [1] : vector<16x32xf32> to vector<16xf32>
    %9 = vector.shape_cast %8 : vector<16xf32> to vector<16x1xf32>
    %cst_8 = arith.constant 3.200000e+01 : f32
    %10 = vector.broadcast %cst_8 : f32 to vector<16x1xf32>
    %11 = arith.divf %9, %10 : vector<16x1xf32>
    %12 = vector.broadcast %11 : vector<16x1xf32> to vector<16x32xf32>
    %13 = arith.subf %3, %12 : vector<16x32xf32>
    %14 = arith.mulf %13, %13 : vector<16x32xf32>
    %cst_9 = arith.constant dense<0.000000e+00> : vector<16xf32>
    %15 = vector.multi_reduction <add>, %14, %cst_9 [1] : vector<16x32xf32> to vector<16xf32>
    %16 = vector.shape_cast %15 : vector<16xf32> to vector<16x1xf32>
    %cst_10 = arith.constant 3.200000e+01 : f32
    %17 = vector.broadcast %cst_10 : f32 to vector<16x1xf32>
    %18 = arith.divf %16, %17 : vector<16x1xf32>
    %19 = vector.broadcast %11 : vector<16x1xf32> to vector<16x32xf32>
    %20 = arith.subf %3, %19 : vector<16x32xf32>
    %cst_11 = arith.constant 9.99999974E-6 : f32
    %21 = vector.broadcast %cst_11 : f32 to vector<16x1xf32>
    %22 = arith.addf %18, %21 : vector<16x1xf32>
    %23 = math.rsqrt %22 : vector<16x1xf32>
    %24 = vector.broadcast %23 : vector<16x1xf32> to vector<16x32xf32>
    %25 = arith.mulf %20, %24 : vector<16x32xf32>
    %26 = vector.broadcast %5 : vector<1x32xf32> to vector<16x32xf32>
    %27 = arith.mulf %25, %26 : vector<16x32xf32>
    %28 = vector.broadcast %7 : vector<1x32xf32> to vector<16x32xf32>
    %29 = arith.addf %27, %28 : vector<16x32xf32>
    %c0_12 = arith.constant 0 : index
    %c0_13 = arith.constant 0 : index
    %c0_14 = arith.constant 0 : index
    %30 = vector.load %arg8[%c0_12, %c0_13, %c0_14] : memref<1x32x96xf32, #tpu.memory_space<vmem>>, vector<1x32x96xf32>
    %31 = vector.shape_cast %30 : vector<1x32x96xf32> to vector<32x96xf32>
    %cst_15 = arith.constant dense<0.000000e+00> : vector<16x96xf32>
    %32 = tpu.matmul %29, %31, %cst_15 {dimension_numbers = #tpu.dot_dimension_numbers<[1], [0], [0], [1], [0, 0, 1, 1], [], []>} : vector<16x32xf32>, vector<32x96xf32>, vector<16x96xf32> -> vector<16x96xf32>
    %33 = vector.extract_strided_slice %32 {offsets = [0, 0], sizes = [16, 16], strides = [1, 1]} : vector<16x96xf32> to vector<16x16xf32>
    %34 = vector.extract_strided_slice %32 {offsets = [0, 32], sizes = [16, 16], strides = [1, 1]} : vector<16x96xf32> to vector<16x16xf32>
    %35 = vector.extract_strided_slice %32 {offsets = [0, 64], sizes = [16, 16], strides = [1, 1]} : vector<16x96xf32> to vector<16x16xf32>
    %cst_16 = arith.constant dense<0.000000e+00> : vector<16x16xf32>
    %36 = tpu.matmul %33, %34, %cst_16 {dimension_numbers = #tpu.dot_dimension_numbers<[1], [1], [0], [0], [0, 0, 1, 0], [], []>} : vector<16x16xf32>, vector<16x16xf32>, vector<16x16xf32> -> vector<16x16xf32>
    %cst_17 = arith.constant dense<0xFF800000> : vector<16xf32>
    %37 = vector.multi_reduction <maximumf>, %36, %cst_17 [1] : vector<16x16xf32> to vector<16xf32>
    %38 = vector.shape_cast %37 : vector<16xf32> to vector<16x1xf32>
    %39 = vector.broadcast %38 : vector<16x1xf32> to vector<16x16xf32>
    %40 = arith.subf %36, %39 : vector<16x16xf32>
    %41 = math.exp %40 : vector<16x16xf32>
    %cst_18 = arith.constant dense<0.000000e+00> : vector<16xf32>
    %42 = vector.multi_reduction <add>, %41, %cst_18 [1] : vector<16x16xf32> to vector<16xf32>
    %43 = vector.shape_cast %42 : vector<16xf32> to vector<16x1xf32>
    %44 = tpu.reciprocal %43 {approx = true} : vector<16x1xf32> -> vector<16x1xf32>
    %45 = vector.broadcast %44 : vector<16x1xf32> to vector<16x16xf32>
    %46 = arith.mulf %41, %45 : vector<16x16xf32>
    %cst_19 = arith.constant dense<0.000000e+00> : vector<16x16xf32>
    %47 = tpu.matmul %46, %35, %cst_19 {dimension_numbers = #tpu.dot_dimension_numbers<[1], [0], [0], [1], [0, 0, 1, 1], [], []>} : vector<16x16xf32>, vector<16x16xf32>, vector<16x16xf32> -> vector<16x16xf32>
    %48 = vector.extract_strided_slice %32 {offsets = [0, 16], sizes = [16, 16], strides = [1, 1]} : vector<16x96xf32> to vector<16x16xf32>
    %49 = vector.extract_strided_slice %32 {offsets = [0, 48], sizes = [16, 16], strides = [1, 1]} : vector<16x96xf32> to vector<16x16xf32>
    %50 = vector.extract_strided_slice %32 {offsets = [0, 80], sizes = [16, 16], strides = [1, 1]} : vector<16x96xf32> to vector<16x16xf32>
    %cst_20 = arith.constant dense<0.000000e+00> : vector<16x16xf32>
    %51 = tpu.matmul %48, %49, %cst_20 {dimension_numbers = #tpu.dot_dimension_numbers<[1], [1], [0], [0], [0, 0, 1, 0], [], []>} : vector<16x16xf32>, vector<16x16xf32>, vector<16x16xf32> -> vector<16x16xf32>
    %cst_21 = arith.constant dense<0xFF800000> : vector<16xf32>
    %52 = vector.multi_reduction <maximumf>, %51, %cst_21 [1] : vector<16x16xf32> to vector<16xf32>
    %53 = vector.shape_cast %52 : vector<16xf32> to vector<16x1xf32>
    %54 = vector.broadcast %53 : vector<16x1xf32> to vector<16x16xf32>
    %55 = arith.subf %51, %54 : vector<16x16xf32>
    %56 = math.exp %55 : vector<16x16xf32>
    %cst_22 = arith.constant dense<0.000000e+00> : vector<16xf32>
    %57 = vector.multi_reduction <add>, %56, %cst_22 [1] : vector<16x16xf32> to vector<16xf32>
    %58 = vector.shape_cast %57 : vector<16xf32> to vector<16x1xf32>
    %59 = tpu.reciprocal %58 {approx = true} : vector<16x1xf32> -> vector<16x1xf32>
    %60 = vector.broadcast %59 : vector<16x1xf32> to vector<16x16xf32>
    %61 = arith.mulf %56, %60 : vector<16x16xf32>
    %cst_23 = arith.constant dense<0.000000e+00> : vector<16x16xf32>
    %62 = tpu.matmul %61, %50, %cst_23 {dimension_numbers = #tpu.dot_dimension_numbers<[1], [0], [0], [1], [0, 0, 1, 1], [], []>} : vector<16x16xf32>, vector<16x16xf32>, vector<16x16xf32> -> vector<16x16xf32>
    %63 = tpu.concatenate %47, %62 in 1 : vector<16x16xf32>, vector<16x16xf32> -> vector<16x32xf32>
    %c0_24 = arith.constant 0 : index
    %c0_25 = arith.constant 0 : index
    %c0_26 = arith.constant 0 : index
    %64 = vector.load %arg9[%c0_24, %c0_25, %c0_26] : memref<1x32x32xf32, #tpu.memory_space<vmem>>, vector<1x32x32xf32>
    %65 = vector.shape_cast %64 : vector<1x32x32xf32> to vector<32x32xf32>
    %cst_27 = arith.constant dense<0.000000e+00> : vector<16x32xf32>
    %66 = tpu.matmul %63, %65, %cst_27 {dimension_numbers = #tpu.dot_dimension_numbers<[1], [0], [0], [1], [0, 0, 1, 1], [], []>} : vector<16x32xf32>, vector<32x32xf32>, vector<16x32xf32> -> vector<16x32xf32>
    %67 = arith.addf %3, %66 : vector<16x32xf32>
    %c0_28 = arith.constant 0 : index
    %c0_29 = arith.constant 0 : index
    %c0_30 = arith.constant 0 : index
    %68 = vector.load %arg10[%c0_28, %c0_29, %c0_30] : memref<1x1x32xf32, #tpu.memory_space<vmem>>, vector<1x1x32xf32>
    %69 = vector.shape_cast %68 : vector<1x1x32xf32> to vector<1x32xf32>
    %70 = vector.broadcast %69 : vector<1x32xf32> to vector<16x32xf32>
    %71 = arith.addf %67, %70 : vector<16x32xf32>
    %c0_31 = arith.constant 0 : index
    %c0_32 = arith.constant 0 : index
    %c0_33 = arith.constant 0 : index
    %72 = vector.load %arg11[%c0_31, %c0_32, %c0_33] : memref<1x1x32xf32, #tpu.memory_space<vmem>>, vector<1x1x32xf32>
    %73 = vector.shape_cast %72 : vector<1x1x32xf32> to vector<1x32xf32>
    %c0_34 = arith.constant 0 : index
    %c0_35 = arith.constant 0 : index
    %c0_36 = arith.constant 0 : index
    %74 = vector.load %arg12[%c0_34, %c0_35, %c0_36] : memref<1x1x32xf32, #tpu.memory_space<vmem>>, vector<1x1x32xf32>
    %75 = vector.shape_cast %74 : vector<1x1x32xf32> to vector<1x32xf32>
    %cst_37 = arith.constant dense<0.000000e+00> : vector<16xf32>
    %76 = vector.multi_reduction <add>, %71, %cst_37 [1] : vector<16x32xf32> to vector<16xf32>
    %77 = vector.shape_cast %76 : vector<16xf32> to vector<16x1xf32>
    %cst_38 = arith.constant 3.200000e+01 : f32
    %78 = vector.broadcast %cst_38 : f32 to vector<16x1xf32>
    %79 = arith.divf %77, %78 : vector<16x1xf32>
    %80 = vector.broadcast %79 : vector<16x1xf32> to vector<16x32xf32>
    %81 = arith.subf %71, %80 : vector<16x32xf32>
    %82 = arith.mulf %81, %81 : vector<16x32xf32>
    %cst_39 = arith.constant dense<0.000000e+00> : vector<16xf32>
    %83 = vector.multi_reduction <add>, %82, %cst_39 [1] : vector<16x32xf32> to vector<16xf32>
    %84 = vector.shape_cast %83 : vector<16xf32> to vector<16x1xf32>
    %cst_40 = arith.constant 3.200000e+01 : f32
    %85 = vector.broadcast %cst_40 : f32 to vector<16x1xf32>
    %86 = arith.divf %84, %85 : vector<16x1xf32>
    %87 = vector.broadcast %79 : vector<16x1xf32> to vector<16x32xf32>
    %88 = arith.subf %71, %87 : vector<16x32xf32>
    %cst_41 = arith.constant 9.99999974E-6 : f32
    %89 = vector.broadcast %cst_41 : f32 to vector<16x1xf32>
    %90 = arith.addf %86, %89 : vector<16x1xf32>
    %91 = math.rsqrt %90 : vector<16x1xf32>
    %92 = vector.broadcast %91 : vector<16x1xf32> to vector<16x32xf32>
    %93 = arith.mulf %88, %92 : vector<16x32xf32>
    %94 = vector.broadcast %73 : vector<1x32xf32> to vector<16x32xf32>
    %95 = arith.mulf %93, %94 : vector<16x32xf32>
    %96 = vector.broadcast %75 : vector<1x32xf32> to vector<16x32xf32>
    %97 = arith.addf %95, %96 : vector<16x32xf32>
    %c0_42 = arith.constant 0 : index
    %c0_43 = arith.constant 0 : index
    %c0_44 = arith.constant 0 : index
    %98 = vector.load %arg13[%c0_42, %c0_43, %c0_44] : memref<1x32x64xf32, #tpu.memory_space<vmem>>, vector<1x32x64xf32>
    %99 = vector.shape_cast %98 : vector<1x32x64xf32> to vector<32x64xf32>
    %cst_45 = arith.constant dense<0.000000e+00> : vector<16x64xf32>
    %100 = tpu.matmul %97, %99, %cst_45 {dimension_numbers = #tpu.dot_dimension_numbers<[1], [0], [0], [1], [0, 0, 1, 1], [], []>} : vector<16x32xf32>, vector<32x64xf32>, vector<16x64xf32> -> vector<16x64xf32>
    %c0_46 = arith.constant 0 : index
    %c0_47 = arith.constant 0 : index
    %c0_48 = arith.constant 0 : index
    %101 = vector.load %arg14[%c0_46, %c0_47, %c0_48] : memref<1x1x64xf32, #tpu.memory_space<vmem>>, vector<1x1x64xf32>
    %102 = vector.shape_cast %101 : vector<1x1x64xf32> to vector<1x64xf32>
    %103 = vector.broadcast %102 : vector<1x64xf32> to vector<16x64xf32>
    %104 = arith.addf %100, %103 : vector<16x64xf32>
    %105 = arith.mulf %104, %104 : vector<16x64xf32>
    %106 = arith.mulf %104, %105 : vector<16x64xf32>
    %cst_49 = arith.constant 4.471500e-02 : f32
    %107 = vector.broadcast %cst_49 : f32 to vector<16x64xf32>
    %108 = arith.mulf %107, %106 : vector<16x64xf32>
    %109 = arith.addf %104, %108 : vector<16x64xf32>
    %cst_50 = arith.constant 0.797884583 : f32
    %110 = vector.broadcast %cst_50 : f32 to vector<16x64xf32>
    %111 = arith.mulf %110, %109 : vector<16x64xf32>
    %112 = math.tanh %111 : vector<16x64xf32>
    %cst_51 = arith.constant 1.000000e+00 : f32
    %113 = vector.broadcast %cst_51 : f32 to vector<16x64xf32>
    %114 = arith.addf %113, %112 : vector<16x64xf32>
    %cst_52 = arith.constant 5.000000e-01 : f32
    %115 = vector.broadcast %cst_52 : f32 to vector<16x64xf32>
    %116 = arith.mulf %115, %114 : vector<16x64xf32>
    %117 = arith.mulf %104, %116 : vector<16x64xf32>
    %c0_53 = arith.constant 0 : index
    %c0_54 = arith.constant 0 : index
    %c0_55 = arith.constant 0 : index
    %118 = vector.load %arg15[%c0_53, %c0_54, %c0_55] : memref<1x64x32xf32, #tpu.memory_space<vmem>>, vector<1x64x32xf32>
    %119 = vector.shape_cast %118 : vector<1x64x32xf32> to vector<64x32xf32>
    %cst_56 = arith.constant dense<0.000000e+00> : vector<16x32xf32>
    %120 = tpu.matmul %117, %119, %cst_56 {dimension_numbers = #tpu.dot_dimension_numbers<[1], [0], [0], [1], [0, 0, 1, 1], [], []>} : vector<16x64xf32>, vector<64x32xf32>, vector<16x32xf32> -> vector<16x32xf32>
    %121 = arith.addf %71, %120 : vector<16x32xf32>
    %c0_57 = arith.constant 0 : index
    %c0_58 = arith.constant 0 : index
    %c0_59 = arith.constant 0 : index
    %122 = vector.load %arg16[%c0_57, %c0_58, %c0_59] : memref<1x1x32xf32, #tpu.memory_space<vmem>>, vector<1x1x32xf32>
    %123 = vector.shape_cast %122 : vector<1x1x32xf32> to vector<1x32xf32>
    %124 = vector.broadcast %123 : vector<1x32xf32> to vector<16x32xf32>
    %125 = arith.addf %121, %124 : vector<16x32xf32>
    %c0_60 = arith.constant 0 : index
    %c0_61 = arith.constant 0 : index
    %126 = vector.load %arg22[%c0_60, %c0_61] : memref<16x32xf32, #tpu.memory_space<vmem>>, vector<16x32xf32>
    tpu.vector_store %arg22[%c0_60, %c0_61], %125 {strides = array<i32>} : memref<16x32xf32, #tpu.memory_space<vmem>>, vector<16x32xf32>,
    %c1_i32 = arith.constant 1 : i32
    %127 = arith.cmpi eq, %arg1, %c1_i32 : i32
    %128 = arith.extui %127 : i1 to i32
    %c0_i32_62 = arith.constant 0 : i32
    %129 = arith.cmpi ne, %128, %c0_i32_62 : i32
    scf.if %129 {
      %c0_63 = arith.constant 0 : index
      %c0_64 = arith.constant 0 : index
      %130 = vector.load %arg17[%c0_63, %c0_64] : memref<1x32xf32, #tpu.memory_space<vmem>>, vector<1x32xf32>
      %c0_65 = arith.constant 0 : index
      %c0_66 = arith.constant 0 : index
      %131 = vector.load %arg18[%c0_65, %c0_66] : memref<1x32xf32, #tpu.memory_space<vmem>>, vector<1x32xf32>
      %cst_67 = arith.constant dense<0.000000e+00> : vector<16xf32>
      %132 = vector.multi_reduction <add>, %125, %cst_67 [1] : vector<16x32xf32> to vector<16xf32>
      %133 = vector.shape_cast %132 : vector<16xf32> to vector<16x1xf32>
      %cst_68 = arith.constant 3.200000e+01 : f32
      %134 = vector.broadcast %cst_68 : f32 to vector<16x1xf32>
      %135 = arith.divf %133, %134 : vector<16x1xf32>
      %136 = vector.broadcast %135 : vector<16x1xf32> to vector<16x32xf32>
      %137 = arith.subf %125, %136 : vector<16x32xf32>
      %138 = arith.mulf %137, %137 : vector<16x32xf32>
      %cst_69 = arith.constant dense<0.000000e+00> : vector<16xf32>
      %139 = vector.multi_reduction <add>, %138, %cst_69 [1] : vector<16x32xf32> to vector<16xf32>
      %140 = vector.shape_cast %139 : vector<16xf32> to vector<16x1xf32>
      %cst_70 = arith.constant 3.200000e+01 : f32
      %141 = vector.broadcast %cst_70 : f32 to vector<16x1xf32>
      %142 = arith.divf %140, %141 : vector<16x1xf32>
      %143 = vector.broadcast %135 : vector<16x1xf32> to vector<16x32xf32>
      %144 = arith.subf %125, %143 : vector<16x32xf32>
      %cst_71 = arith.constant 9.99999974E-6 : f32
      %145 = vector.broadcast %cst_71 : f32 to vector<16x1xf32>
      %146 = arith.addf %142, %145 : vector<16x1xf32>
      %147 = math.rsqrt %146 : vector<16x1xf32>
      %148 = vector.broadcast %147 : vector<16x1xf32> to vector<16x32xf32>
      %149 = arith.mulf %144, %148 : vector<16x32xf32>
      %150 = vector.broadcast %130 : vector<1x32xf32> to vector<16x32xf32>
      %151 = arith.mulf %149, %150 : vector<16x32xf32>
      %152 = vector.broadcast %131 : vector<1x32xf32> to vector<16x32xf32>
      %153 = arith.addf %151, %152 : vector<16x32xf32>
      %c0_72 = arith.constant 0 : index
      %c0_73 = arith.constant 0 : index
      %154 = vector.load %arg19[%c0_72, %c0_73] : memref<32x48xf32, #tpu.memory_space<vmem>>, vector<32x48xf32>
      %cst_74 = arith.constant dense<0.000000e+00> : vector<16x48xf32>
      %155 = tpu.matmul %153, %154, %cst_74 {dimension_numbers = #tpu.dot_dimension_numbers<[1], [0], [0], [1], [0, 0, 1, 1], [], []>} : vector<16x32xf32>, vector<32x48xf32>, vector<16x48xf32> -> vector<16x48xf32>
      %c0_75 = arith.constant 0 : index
      %c0_76 = arith.constant 0 : index
      %156 = vector.load %arg20[%c0_75, %c0_76] : memref<1x48xf32, #tpu.memory_space<vmem>>, vector<1x48xf32>
      %157 = vector.broadcast %156 : vector<1x48xf32> to vector<16x48xf32>
      %158 = arith.addf %155, %157 : vector<16x48xf32>
      %c0_77 = arith.constant 0 : index
      %c0_78 = arith.constant 0 : index
      %c0_79 = arith.constant 0 : index
      %159 = vector.load %arg21[%c0_77, %c0_78, %c0_79] : memref<1x16x48xf32, #tpu.memory_space<vmem>>, vector<1x16x48xf32>
      %160 = vector.shape_cast %159 : vector<1x16x48xf32> to vector<16x48xf32>
      %161 = vector.shape_cast %158 : vector<16x48xf32> to vector<1x16x48xf32>
      tpu.vector_store %arg21[%c0_77, %c0_78, %c0_79], %161 {strides = array<i32>} : memref<1x16x48xf32, #tpu.memory_space<vmem>>, vector<1x16x48xf32>,
    } else {
    }
    return
  }
  func.func @transform_0(%arg0: i32, %arg1: i32) -> (i32, i32, i32) {
    %c0_i32 = arith.constant 0 : i32
    %c0_i32_0 = arith.constant 0 : i32
    %c0_i32_1 = arith.constant 0 : i32
    return %arg0, %c0_i32, %c0_i32_0 : i32, i32, i32
  }
  func.func @transform_1(%arg0: i32, %arg1: i32) -> (i32, i32) {
    %c0_i32 = arith.constant 0 : i32
    %c0_i32_0 = arith.constant 0 : i32
    %c0_i32_1 = arith.constant 0 : i32
    return %c0_i32, %c0_i32_0 : i32, i32
  }
  func.func @transform_2(%arg0: i32, %arg1: i32) -> (i32, i32) {
    %c0_i32 = arith.constant 0 : i32
    %c0_i32_0 = arith.constant 0 : i32
    %c0_i32_1 = arith.constant 0 : i32
    return %c0_i32, %c0_i32_0 : i32, i32
  }
  func.func @transform_3(%arg0: i32, %arg1: i32) -> (i32, i32, i32) {
    %c0_i32 = arith.constant 0 : i32
    %c0_i32_0 = arith.constant 0 : i32
    %c0_i32_1 = arith.constant 0 : i32
    %c0_i32_2 = arith.constant 0 : i32
    return %c0_i32, %c0_i32_0, %c0_i32_1 : i32, i32, i32
  }
  func.func @transform_4(%arg0: i32, %arg1: i32) -> (i32, i32, i32) {
    %c0_i32 = arith.constant 0 : i32
    %c0_i32_0 = arith.constant 0 : i32
    %c0_i32_1 = arith.constant 0 : i32
    return %arg1, %c0_i32, %c0_i32_0 : i32, i32, i32
  }
  func.func @transform_5(%arg0: i32, %arg1: i32) -> (i32, i32, i32) {
    %c0_i32 = arith.constant 0 : i32
    %c0_i32_0 = arith.constant 0 : i32
    %c0_i32_1 = arith.constant 0 : i32
    return %arg1, %c0_i32, %c0_i32_0 : i32, i32, i32
  }
  func.func @transform_6(%arg0: i32, %arg1: i32) -> (i32, i32, i32) {
    %c0_i32 = arith.constant 0 : i32
    %c0_i32_0 = arith.constant 0 : i32
    %c0_i32_1 = arith.constant 0 : i32
    return %arg1, %c0_i32, %c0_i32_0 : i32, i32, i32
  }
  func.func @transform_7(%arg0: i32, %arg1: i32) -> (i32, i32, i32) {
    %c0_i32 = arith.constant 0 : i32
    %c0_i32_0 = arith.constant 0 : i32
    %c0_i32_1 = arith.constant 0 : i32
    return %arg1, %c0_i32, %c0_i32_0 : i32, i32, i32
  }
  func.func @transform_8(%arg0: i32, %arg1: i32) -> (i32, i32, i32) {
    %c0_i32 = arith.constant 0 : i32
    %c0_i32_0 = arith.constant 0 : i32
    %c0_i32_1 = arith.constant 0 : i32
    return %arg1, %c0_i32, %c0_i32_0 : i32, i32, i32
  }
  func.func @transform_9(%arg0: i32, %arg1: i32) -> (i32, i32, i32) {
    %c0_i32 = arith.constant 0 : i32
    %c0_i32_0 = arith.constant 0 : i32
    %c0_i32_1 = arith.constant 0 : i32
    return %arg1, %c0_i32, %c0_i32_0 : i32, i32, i32
  }
  func.func @transform_10(%arg0: i32, %arg1: i32) -> (i32, i32, i32) {
    %c0_i32 = arith.constant 0 : i32
    %c0_i32_0 = arith.constant 0 : i32
    %c0_i32_1 = arith.constant 0 : i32
    return %arg1, %c0_i32, %c0_i32_0 : i32, i32, i32
  }
  func.func @transform_11(%arg0: i32, %arg1: i32) -> (i32, i32, i32) {
    %c0_i32 = arith.constant 0 : i32
    %c0_i32_0 = arith.constant 0 : i32
    %c0_i32_1 = arith.constant 0 : i32
    return %arg1, %c0_i32, %c0_i32_0 : i32, i32, i32
  }
  func.func @transform_12(%arg0: i32, %arg1: i32) -> (i32, i32, i32) {
    %c0_i32 = arith.constant 0 : i32
    %c0_i32_0 = arith.constant 0 : i32
    %c0_i32_1 = arith.constant 0 : i32
    return %arg1, %c0_i32, %c0_i32_0 : i32, i32, i32
  }
  func.func @transform_13(%arg0: i32, %arg1: i32) -> (i32, i32, i32) {
    %c0_i32 = arith.constant 0 : i32
    %c0_i32_0 = arith.constant 0 : i32
    %c0_i32_1 = arith.constant 0 : i32
    return %arg1, %c0_i32, %c0_i32_0 : i32, i32, i32
  }
  func.func @transform_14(%arg0: i32, %arg1: i32) -> (i32, i32, i32) {
    %c0_i32 = arith.constant 0 : i32
    %c0_i32_0 = arith.constant 0 : i32
    %c0_i32_1 = arith.constant 0 : i32
    return %arg1, %c0_i32, %c0_i32_0 : i32, i32, i32
  }
  func.func @transform_15(%arg0: i32, %arg1: i32) -> (i32, i32) {
    %c0_i32 = arith.constant 0 : i32
    %c0_i32_0 = arith.constant 0 : i32
    %c0_i32_1 = arith.constant 0 : i32
    return %c0_i32, %c0_i32_0 : i32, i32
  }
  func.func @transform_16(%arg0: i32, %arg1: i32) -> (i32, i32) {
    %c0_i32 = arith.constant 0 : i32
    %c0_i32_0 = arith.constant 0 : i32
    %c0_i32_1 = arith.constant 0 : i32
    return %c0_i32, %c0_i32_0 : i32, i32
  }
  func.func @transform_17(%arg0: i32, %arg1: i32) -> (i32, i32) {
    %c0_i32 = arith.constant 0 : i32
    %c0_i32_0 = arith.constant 0 : i32
    %c0_i32_1 = arith.constant 0 : i32
    return %c0_i32, %c0_i32_0 : i32, i32
  }
  func.func @transform_18(%arg0: i32, %arg1: i32) -> (i32, i32) {
    %c0_i32 = arith.constant 0 : i32
    %c0_i32_0 = arith.constant 0 : i32
    %c0_i32_1 = arith.constant 0 : i32
    return %c0_i32, %c0_i32_0 : i32, i32
  }
  func.func @transform_19(%arg0: i32, %arg1: i32) -> (i32, i32, i32) {
    %c0_i32 = arith.constant 0 : i32
    %c0_i32_0 = arith.constant 0 : i32
    %c0_i32_1 = arith.constant 0 : i32
    return %arg0, %c0_i32, %c0_i32_0 : i32, i32, i32
  }
}

</mosaic_0001>

<llo_original>
// kernel: encoder_forward.1
$region0: #{encoder_forward.1}
  #allocation0 [shape = 'u32[]', space=smem, size = 0x4, offset = 0x4, fixed_abs, tag = 'smem constant byte address 0x4 - core index']
  #allocation1 [shape = 'u32[72,128]{1,0:T(1,128)}', space=vmem, size = 0x9000, scoped, tag = 'internal scratch']
  #allocation2 [shape = 'f32[16,32]{1,0:T(8,128)}', space=vmem, size = 0x2000, scoped, tag = 'scratch operand']
  %s0 = inlined_call_operand.vmem [shape: f32[2,16,48], index: 0, kind: input, shape index: {}]
  %s1 = inlined_call_operand.vmem [shape: f32[48,32], index: 1, kind: input, shape index: {}]
  %s2 = inlined_call_operand.vmem [shape: f32[1,32], index: 2, kind: input, shape index: {}]
  %s3 = inlined_call_operand.vmem [shape: f32[1,16,32], index: 3, kind: input, shape index: {}]
  %s4 = inlined_call_operand.vmem [shape: f32[2,1,32], index: 4, kind: input, shape index: {}]
  %s5 = inlined_call_operand.vmem [shape: f32[2,1,32], index: 5, kind: input, shape index: {}]
  %s6 = inlined_call_operand.vmem [shape: f32[2,32,96], index: 6, kind: input, shape index: {}]
  %s7 = inlined_call_operand.vmem [shape: f32[2,32,32], index: 7, kind: input, shape index: {}]
  %s8 = inlined_call_operand.vmem [shape: f32[2,1,32], index: 8, kind: input, shape index: {}]
  %s9 = inlined_call_operand.vmem [shape: f32[2,1,32], index: 9, kind: input, shape index: {}]
  %s10 = inlined_call_operand.vmem [shape: f32[2,1,32], index: 10, kind: input, shape index: {}]
  %s11 = inlined_call_operand.vmem [shape: f32[2,32,64], index: 11, kind: input, shape index: {}]
  %s12 = inlined_call_operand.vmem [shape: f32[2,1,64], index: 12, kind: input, shape index: {}]
  %s13 = inlined_call_operand.vmem [shape: f32[2,64,32], index: 13, kind: input, shape index: {}]
  %s14 = inlined_call_operand.vmem [shape: f32[2,1,32], index: 14, kind: input, shape index: {}]
  %s15 = inlined_call_operand.vmem [shape: f32[1,32], index: 15, kind: input, shape index: {}]
  %s16 = inlined_call_operand.vmem [shape: f32[1,32], index: 16, kind: input, shape index: {}]
  %s17 = inlined_call_operand.vmem [shape: f32[32,48], index: 17, kind: input, shape index: {}]
  %s18 = inlined_call_operand.vmem [shape: f32[1,48], index: 18, kind: input, shape index: {}]
  %s19 = inlined_call_operand.vmem [shape: f32[2,16,48], index: 19, kind: output, shape index: {}]
  %s20 = sld [smem:[#allocation0]]
  $region117: #{encoder_forward.1} parent=0
    _
  %s22 = ssub.s32 1, %s20
  %s23 = scalar_select 0, %s22, %s20
  loop: start=0, step=1, limit=6
  $region2: #{encoder_forward.1} parent=0 // loop_pre_header
    _
  $region3: #{encoder_forward.1} parent=0 // loop_header
    %s25 = sphi 0, %s29
    %p26 = scmp.ge.s32.totalorder %s25, 6
    %s32 = sphi 0, %s44
    %s33 = sphi 0, %s40
    %s34 = sphi 0, %s32
    %s35 = sphi 0, %s33
    %s36 = sphi 0, %s34
    %s37 = sphi 0, %s35
    %s47 = sphi 0, %s49
    %s50 = sphi 0, %s47
    %s51 = sphi 0, %s50
    %s67 = sphi 0, %s51
    %s71 = sphi 0, %s71
    %s73 = sphi 0, %s71
    %s74 = sphi 0, %s73
    %s88 = sphi 0, %s74
    %s92 = sphi 0, %s92
    %s94 = sphi 0, %s92
    %s95 = sphi 0, %s94
    %s109 = sphi 0, %s95
    %s113 = sphi 0, %s113
    %s115 = sphi 0, %s113
    %s116 = sphi 0, %s115
    %s130 = sphi 0, %s116
    %s136 = sphi 0, %s138
    %s139 = sphi 0, %s136
    %s140 = sphi 0, %s139
    %s156 = sphi 0, %s140
    %s162 = sphi 0, %s164
    %s165 = sphi 0, %s162
    %s166 = sphi 0, %s165
    %s182 = sphi 0, %s166
    %s188 = sphi 0, %s190
    %s191 = sphi 0, %s188
    %s192 = sphi 0, %s191
    %s208 = sphi 0, %s192
    %s214 = sphi 0, %s216
    %s217 = sphi 0, %s214
    %s218 = sphi 0, %s217
    %s234 = sphi 0, %s218
    %s240 = sphi 0, %s242
    %s243 = sphi 0, %s240
    %s244 = sphi 0, %s243
    %s260 = sphi 0, %s244
    %s266 = sphi 0, %s268
    %s269 = sphi 0, %s266
    %s270 = sphi 0, %s269
    %s286 = sphi 0, %s270
    %s292 = sphi 0, %s294
    %s295 = sphi 0, %s292
    %s296 = sphi 0, %s295
    %s312 = sphi 0, %s296
    %s318 = sphi 0, %s320
    %s321 = sphi 0, %s318
    %s322 = sphi 0, %s321
    %s338 = sphi 0, %s322
    %s344 = sphi 0, %s346
    %s347 = sphi 0, %s344
    %s348 = sphi 0, %s347
    %s364 = sphi 0, %s348
    %s370 = sphi 0, %s372
    %s373 = sphi 0, %s370
    %s374 = sphi 0, %s373
    %s390 = sphi 0, %s374
    %s396 = sphi 0, %s398
    %s399 = sphi 0, %s396
    %s400 = sphi 0, %s399
    %s416 = sphi 0, %s400
    %s420 = sphi 0, %s420
    %s422 = sphi 0, %s420
    %s423 = sphi 0, %s422
    %s437 = sphi 0, %s423
    %s441 = sphi 0, %s441
    %s443 = sphi 0, %s441
    %s444 = sphi 0, %s443
    %s458 = sphi 0, %s444
    %s462 = sphi 0, %s462
    %s464 = sphi 0, %s462
    %s465 = sphi 0, %s464
    %s479 = sphi 0, %s465
    %s483 = sphi 0, %s483
    %s485 = sphi 0, %s483
    %s486 = sphi 0, %s485
    %s500 = sphi 0, %s486
    %s506 = sphi 0, %s508
    %s509 = sphi 0, %s506
    %s510 = sphi 0, %s509
    %s526 = sphi 0, %s510
  $region4: #{encoder_forward.1} parent=0 // loop_header_branch
    %28 = sbr.rel (%p26) target = $region8
  $region5: #{encoder_forward.1} parent=0 // loop_body
    %s30 = ssub.s32 %s25, 1
    %s31 = ssub.s32 %s25, 2
    %s38 = sadd.s32 1, %s33
    %p39 = scmp.ge.s32.totalorder %s38, 2
    %s40 = scalar_select %p39, 0, %s38
    %s41 = sadd.s32 1, %s32
    %s42 = scalar_select %p39, %s41, %s32
    %p43 = scmp.ge.s32.totalorder %s42, 2
    %s44 = scalar_select %p43, 0, %s42
    %s45 = ssub.s32 %s32, %s44
    %p46 = scmp.eq.s32.totalorder %s45, 0
    %s48 = sadd.s32 %s47, 1
    %s49 = scalar_select %p46, %s47, %s48
    %p52 = pneg %p46
    %p53 = scmp.eq.s32.totalorder %s25, 3
    %p54 = por %p52, %p53
    %p55 = scmp.ne.s32.totalorder %s47, %s50
    %p56 = scmp.eq.s32.totalorder %s25, 0
    %p57 = por %p55, %p56
    %p58 = scmp.ne.s32.totalorder %s47, %s50
    %p59 = scmp.eq.s32.totalorder %s30, 3
    %p60 = por %p58, %p59
    %p61 = scmp.ne.s32.totalorder %s50, %s51
    %p62 = scmp.eq.s32.totalorder %s30, 0
    %p63 = por %p61, %p62
    %p64 = scmp.ne.s32.totalorder %s50, %s51
    %p65 = scmp.eq.s32.totalorder %s31, 3
    %p66 = por %p64, %p65
    %p68 = scmp.ne.s32.totalorder %s51, %s67
    %p69 = scmp.eq.s32.totalorder %s31, 0
    %p70 = por %p68, %p69
    %s72 = sadd.s32 %s71, 1
    %p75 = scmp.eq.s32.totalorder %s25, 3
    %p76 = scmp.ne.s32.totalorder %s71, %s73
    %p77 = scmp.eq.s32.totalorder %s25, 0
    %p78 = por %p76, %p77
    %p79 = scmp.ne.s32.totalorder %s71, %s73
    %p80 = scmp.eq.s32.totalorder %s30, 3
    %p81 = por %p79, %p80
    %p82 = scmp.ne.s32.totalorder %s73, %s74
    %p83 = scmp.eq.s32.totalorder %s30, 0
    %p84 = por %p82, %p83
    %p85 = scmp.ne.s32.totalorder %s73, %s74
    %p86 = scmp.eq.s32.totalorder %s31, 3
    %p87 = por %p85, %p86
    %p89 = scmp.ne.s32.totalorder %s74, %s88
    %p90 = scmp.eq.s32.totalorder %s31, 0
    %p91 = por %p89, %p90
    %s93 = sadd.s32 %s92, 1
    %p96 = scmp.eq.s32.totalorder %s25, 3
    %p97 = scmp.ne.s32.totalorder %s92, %s94
    %p98 = scmp.eq.s32.totalorder %s25, 0
    %p99 = por %p97, %p98
    %p100 = scmp.ne.s32.totalorder %s92, %s94
    %p101 = scmp.eq.s32.totalorder %s30, 3
    %p102 = por %p100, %p101
    %p103 = scmp.ne.s32.totalorder %s94, %s95
    %p104 = scmp.eq.s32.totalorder %s30, 0
    %p105 = por %p103, %p104
    %p106 = scmp.ne.s32.totalorder %s94, %s95
    %p107 = scmp.eq.s32.totalorder %s31, 3
    %p108 = por %p106, %p107
    %p110 = scmp.ne.s32.totalorder %s95, %s109
    %p111 = scmp.eq.s32.totalorder %s31, 0
    %p112 = por %p110, %p111
    %s114 = sadd.s32 %s113, 1
    %p117 = scmp.eq.s32.totalorder %s25, 3
    %p118 = scmp.ne.s32.totalorder %s113, %s115
    %p119 = scmp.eq.s32.totalorder %s25, 0
    %p120 = por %p118, %p119
    %p121 = scmp.ne.s32.totalorder %s113, %s115
    %p122 = scmp.eq.s32.totalorder %s30, 3
    %p123 = por %p121, %p122
    %p124 = scmp.ne.s32.totalorder %s115, %s116
    %p125 = scmp.eq.s32.totalorder %s30, 0
    %p126 = por %p124, %p125
    %p127 = scmp.ne.s32.totalorder %s115, %s116
    %p128 = scmp.eq.s32.totalorder %s31, 3
    %p129 = por %p127, %p128
    %p131 = scmp.ne.s32.totalorder %s116, %s130
    %p132 = scmp.eq.s32.totalorder %s31, 0
    %p133 = por %p131, %p132
    %s134 = ssub.s32 %s33, %s40
    %p135 = scmp.eq.s32.totalorder %s134, 0
    %s137 = sadd.s32 %s136, 1
    %s138 = scalar_select %p135, %s136, %s137
    %p141 = pneg %p135
    %p142 = scmp.eq.s32.totalorder %s25, 3
    %p143 = por %p141, %p142
    %p144 = scmp.ne.s32.totalorder %s136, %s139
    %p145 = scmp.eq.s32.totalorder %s25, 0
    %p146 = por %p144, %p145
    %p147 = scmp.ne.s32.totalorder %s136, %s139
    %p148 = scmp.eq.s32.totalorder %s30, 3
    %p149 = por %p147, %p148
    %p150 = scmp.ne.s32.totalorder %s139, %s140
    %p151 = scmp.eq.s32.totalorder %s30, 0
    %p152 = por %p150, %p151
    %p153 = scmp.ne.s32.totalorder %s139, %s140
    %p154 = scmp.eq.s32.totalorder %s31, 3
    %p155 = por %p153, %p154
    %p157 = scmp.ne.s32.totalorder %s140, %s156
    %p158 = scmp.eq.s32.totalorder %s31, 0
    %p159 = por %p157, %p158
    %s160 = ssub.s32 %s33, %s40
    %p161 = scmp.eq.s32.totalorder %s160, 0
    %s163 = sadd.s32 %s162, 1
    %s164 = scalar_select %p161, %s162, %s163
    %p167 = pneg %p161
    %p168 = scmp.eq.s32.totalorder %s25, 3
    %p169 = por %p167, %p168
    %p170 = scmp.ne.s32.totalorder %s162, %s165
    %p171 = scmp.eq.s32.totalorder %s25, 0
    %p172 = por %p170, %p171
    %p173 = scmp.ne.s32.totalorder %s162, %s165
    %p174 = scmp.eq.s32.totalorder %s30, 3
    %p175 = por %p173, %p174
    %p176 = scmp.ne.s32.totalorder %s165, %s166
    %p177 = scmp.eq.s32.totalorder %s30, 0
    %p178 = por %p176, %p177
    %p179 = scmp.ne.s32.totalorder %s165, %s166
    %p180 = scmp.eq.s32.totalorder %s31, 3
    %p181 = por %p179, %p180
    %p183 = scmp.ne.s32.totalorder %s166, %s182
    %p184 = scmp.eq.s32.totalorder %s31, 0
    %p185 = por %p183, %p184
    %s186 = ssub.s32 %s33, %s40
    %p187 = scmp.eq.s32.totalorder %s186, 0
    %s189 = sadd.s32 %s188, 1
    %s190 = scalar_select %p187, %s188, %s189
    %p193 = pneg %p187
    %p194 = scmp.eq.s32.totalorder %s25, 3
    %p195 = por %p193, %p194
    %p196 = scmp.ne.s32.totalorder %s188, %s191
    %p197 = scmp.eq.s32.totalorder %s25, 0
    %p198 = por %p196, %p197
    %p199 = scmp.ne.s32.totalorder %s188, %s191
    %p200 = scmp.eq.s32.totalorder %s30, 3
    %p201 = por %p199, %p200
    %p202 = scmp.ne.s32.totalorder %s191, %s192
    %p203 = scmp.eq.s32.totalorder %s30, 0
    %p204 = por %p202, %p203
    %p205 = scmp.ne.s32.totalorder %s191, %s192
    %p206 = scmp.eq.s32.totalorder %s31, 3
    %p207 = por %p205, %p206
    %p209 = scmp.ne.s32.totalorder %s192, %s208
    %p210 = scmp.eq.s32.totalorder %s31, 0
    %p211 = por %p209, %p210
    %s212 = ssub.s32 %s33, %s40
    %p213 = scmp.eq.s32.totalorder %s212, 0
    %s215 = sadd.s32 %s214, 1
    %s216 = scalar_select %p213, %s214, %s215
    %p219 = pneg %p213
    %p220 = scmp.eq.s32.totalorder %s25, 3
    %p221 = por %p219, %p220
    %p222 = scmp.ne.s32.totalorder %s214, %s217
    %p223 = scmp.eq.s32.totalorder %s25, 0
    %p224 = por %p222, %p223
    %p225 = scmp.ne.s32.totalorder %s214, %s217
    %p226 = scmp.eq.s32.totalorder %s30, 3
    %p227 = por %p225, %p226
    %p228 = scmp.ne.s32.totalorder %s217, %s218
    %p229 = scmp.eq.s32.totalorder %s30, 0
    %p230 = por %p228, %p229
    %p231 = scmp.ne.s32.totalorder %s217, %s218
    %p232 = scmp.eq.s32.totalorder %s31, 3
    %p233 = por %p231, %p232
    %p235 = scmp.ne.s32.totalorder %s218, %s234
    %p236 = scmp.eq.s32.totalorder %s31, 0
    %p237 = por %p235, %p236
    %s238 = ssub.s32 %s33, %s40
    %p239 = scmp.eq.s32.totalorder %s238, 0
    %s241 = sadd.s32 %s240, 1
    %s242 = scalar_select %p239, %s240, %s241
    %p245 = pneg %p239
    %p246 = scmp.eq.s32.totalorder %s25, 3
    %p247 = por %p245, %p246
    %p248 = scmp.ne.s32.totalorder %s240, %s243
    %p249 = scmp.eq.s32.totalorder %s25, 0
    %p250 = por %p248, %p249
    %p251 = scmp.ne.s32.totalorder %s240, %s243
    %p252 = scmp.eq.s32.totalorder %s30, 3
    %p253 = por %p251, %p252
    %p254 = scmp.ne.s32.totalorder %s243, %s244
    %p255 = scmp.eq.s32.totalorder %s30, 0
    %p256 = por %p254, %p255
    %p257 = scmp.ne.s32.totalorder %s243, %s244
    %p258 = scmp.eq.s32.totalorder %s31, 3
    %p259 = por %p257, %p258
    %p261 = scmp.ne.s32.totalorder %s244, %s260
    %p262 = scmp.eq.s32.totalorder %s31, 0
    %p263 = por %p261, %p262
    %s264 = ssub.s32 %s33, %s40
    %p265 = scmp.eq.s32.totalorder %s264, 0
    %s267 = sadd.s32 %s266, 1
    %s268 = scalar_select %p265, %s266, %s267
    %p271 = pneg %p265
    %p272 = scmp.eq.s32.totalorder %s25, 3
    %p273 = por %p271, %p272
    %p274 = scmp.ne.s32.totalorder %s266, %s269
    %p275 = scmp.eq.s32.totalorder %s25, 0
    %p276 = por %p274, %p275
    %p277 = scmp.ne.s32.totalorder %s266, %s269
    %p278 = scmp.eq.s32.totalorder %s30, 3
    %p279 = por %p277, %p278
    %p280 = scmp.ne.s32.totalorder %s269, %s270
    %p281 = scmp.eq.s32.totalorder %s30, 0
    %p282 = por %p280, %p281
    %p283 = scmp.ne.s32.totalorder %s269, %s270
    %p284 = scmp.eq.s32.totalorder %s31, 3
    %p285 = por %p283, %p284
    %p287 = scmp.ne.s32.totalorder %s270, %s286
    %p288 = scmp.eq.s32.totalorder %s31, 0
    %p289 = por %p287, %p288
    %s290 = ssub.s32 %s33, %s40
    %p291 = scmp.eq.s32.totalorder %s290, 0
    %s293 = sadd.s32 %s292, 1
    %s294 = scalar_select %p291, %s292, %s293
    %p297 = pneg %p291
    %p298 = scmp.eq.s32.totalorder %s25, 3
    %p299 = por %p297, %p298
    %p300 = scmp.ne.s32.totalorder %s292, %s295
    %p301 = scmp.eq.s32.totalorder %s25, 0
    %p302 = por %p300, %p301
    %p303 = scmp.ne.s32.totalorder %s292, %s295
    %p304 = scmp.eq.s32.totalorder %s30, 3
    %p305 = por %p303, %p304
    %p306 = scmp.ne.s32.totalorder %s295, %s296
    %p307 = scmp.eq.s32.totalorder %s30, 0
    %p308 = por %p306, %p307
    %p309 = scmp.ne.s32.totalorder %s295, %s296
    %p310 = scmp.eq.s32.totalorder %s31, 3
    %p311 = por %p309, %p310
    %p313 = scmp.ne.s32.totalorder %s296, %s312
    %p314 = scmp.eq.s32.totalorder %s31, 0
    %p315 = por %p313, %p314
    %s316 = ssub.s32 %s33, %s40
    %p317 = scmp.eq.s32.totalorder %s316, 0
    %s319 = sadd.s32 %s318, 1
    %s320 = scalar_select %p317, %s318, %s319
    %p323 = pneg %p317
    %p324 = scmp.eq.s32.totalorder %s25, 3
    %p325 = por %p323, %p324
    %p326 = scmp.ne.s32.totalorder %s318, %s321
    %p327 = scmp.eq.s32.totalorder %s25, 0
    %p328 = por %p326, %p327
    %p329 = scmp.ne.s32.totalorder %s318, %s321
    %p330 = scmp.eq.s32.totalorder %s30, 3
    %p331 = por %p329, %p330
    %p332 = scmp.ne.s32.totalorder %s321, %s322
    %p333 = scmp.eq.s32.totalorder %s30, 0
    %p334 = por %p332, %p333
    %p335 = scmp.ne.s32.totalorder %s321, %s322
    %p336 = scmp.eq.s32.totalorder %s31, 3
    %p337 = por %p335, %p336
    %p339 = scmp.ne.s32.totalorder %s322, %s338
    %p340 = scmp.eq.s32.totalorder %s31, 0
    %p341 = por %p339, %p340
    %s342 = ssub.s32 %s33, %s40
    %p343 = scmp.eq.s32.totalorder %s342, 0
    %s345 = sadd.s32 %s344, 1
    %s346 = scalar_select %p343, %s344, %s345
    %p349 = pneg %p343
    %p350 = scmp.eq.s32.totalorder %s25, 3
    %p351 = por %p349, %p350
    %p352 = scmp.ne.s32.totalorder %s344, %s347
    %p353 = scmp.eq.s32.totalorder %s25, 0
    %p354 = por %p352, %p353
    %p355 = scmp.ne.s32.totalorder %s344, %s347
    %p356 = scmp.eq.s32.totalorder %s30, 3
    %p357 = por %p355, %p356
    %p358 = scmp.ne.s32.totalorder %s347, %s348
    %p359 = scmp.eq.s32.totalorder %s30, 0
    %p360 = por %p358, %p359
    %p361 = scmp.ne.s32.totalorder %s347, %s348
    %p362 = scmp.eq.s32.totalorder %s31, 3
    %p363 = por %p361, %p362
    %p365 = scmp.ne.s32.totalorder %s348, %s364
    %p366 = scmp.eq.s32.totalorder %s31, 0
    %p367 = por %p365, %p366
    %s368 = ssub.s32 %s33, %s40
    %p369 = scmp.eq.s32.totalorder %s368, 0
    %s371 = sadd.s32 %s370, 1
    %s372 = scalar_select %p369, %s370, %s371
    %p375 = pneg %p369
    %p376 = scmp.eq.s32.totalorder %s25, 3
    %p377 = por %p375, %p376
    %p378 = scmp.ne.s32.totalorder %s370, %s373
    %p379 = scmp.eq.s32.totalorder %s25, 0
    %p380 = por %p378, %p379
    %p381 = scmp.ne.s32.totalorder %s370, %s373
    %p382 = scmp.eq.s32.totalorder %s30, 3
    %p383 = por %p381, %p382
    %p384 = scmp.ne.s32.totalorder %s373, %s374
    %p385 = scmp.eq.s32.totalorder %s30, 0
    %p386 = por %p384, %p385
    %p387 = scmp.ne.s32.totalorder %s373, %s374
    %p388 = scmp.eq.s32.totalorder %s31, 3
    %p389 = por %p387, %p388
    %p391 = scmp.ne.s32.totalorder %s374, %s390
    %p392 = scmp.eq.s32.totalorder %s31, 0
    %p393 = por %p391, %p392
    %s394 = ssub.s32 %s33, %s40
    %p395 = scmp.eq.s32.totalorder %s394, 0
    %s397 = sadd.s32 %s396, 1
    %s398 = scalar_select %p395, %s396, %s397
    %p401 = pneg %p395
    %p402 = scmp.eq.s32.totalorder %s25, 3
    %p403 = por %p401, %p402
    %p404 = scmp.ne.s32.totalorder %s396, %s399
    %p405 = scmp.eq.s32.totalorder %s25, 0
    %p406 = por %p404, %p405
    %p407 = scmp.ne.s32.totalorder %s396, %s399
    %p408 = scmp.eq.s32.totalorder %s30, 3
    %p409 = por %p407, %p408
    %p410 = scmp.ne.s32.totalorder %s399, %s400
    %p411 = scmp.eq.s32.totalorder %s30, 0
    %p412 = por %p410, %p411
    %p413 = scmp.ne.s32.totalorder %s399, %s400
    %p414 = scmp.eq.s32.totalorder %s31, 3
    %p415 = por %p413, %p414
    %p417 = scmp.ne.s32.totalorder %s400, %s416
    %p418 = scmp.eq.s32.totalorder %s31, 0
    %p419 = por %p417, %p418
    %s421 = sadd.s32 %s420, 1
    %p424 = scmp.eq.s32.totalorder %s25, 3
    %p425 = scmp.ne.s32.totalorder %s420, %s422
    %p426 = scmp.eq.s32.totalorder %s25, 0
    %p427 = por %p425, %p426
    %p428 = scmp.ne.s32.totalorder %s420, %s422
    %p429 = scmp.eq.s32.totalorder %s30, 3
    %p430 = por %p428, %p429
    %p431 = scmp.ne.s32.totalorder %s422, %s423
    %p432 = scmp.eq.s32.totalorder %s30, 0
    %p433 = por %p431, %p432
    %p434 = scmp.ne.s32.totalorder %s422, %s423
    %p435 = scmp.eq.s32.totalorder %s31, 3
    %p436 = por %p434, %p435
    %p438 = scmp.ne.s32.totalorder %s423, %s437
    %p439 = scmp.eq.s32.totalorder %s31, 0
    %p440 = por %p438, %p439
    %s442 = sadd.s32 %s441, 1
    %p445 = scmp.eq.s32.totalorder %s25, 3
    %p446 = scmp.ne.s32.totalorder %s441, %s443
    %p447 = scmp.eq.s32.totalorder %s25, 0
    %p448 = por %p446, %p447
    %p449 = scmp.ne.s32.totalorder %s441, %s443
    %p450 = scmp.eq.s32.totalorder %s30, 3
    %p451 = por %p449, %p450
    %p452 = scmp.ne.s32.totalorder %s443, %s444
    %p453 = scmp.eq.s32.totalorder %s30, 0
    %p454 = por %p452, %p453
    %p455 = scmp.ne.s32.totalorder %s443, %s444
    %p456 = scmp.eq.s32.totalorder %s31, 3
    %p457 = por %p455, %p456
    %p459 = scmp.ne.s32.totalorder %s444, %s458
    %p460 = scmp.eq.s32.totalorder %s31, 0
    %p461 = por %p459, %p460
    %s463 = sadd.s32 %s462, 1
    %p466 = scmp.eq.s32.totalorder %s25, 3
    %p467 = scmp.ne.s32.totalorder %s462, %s464
    %p468 = scmp.eq.s32.totalorder %s25, 0
    %p469 = por %p467, %p468
    %p470 = scmp.ne.s32.totalorder %s462, %s464
    %p471 = scmp.eq.s32.totalorder %s30, 3
    %p472 = por %p470, %p471
    %p473 = scmp.ne.s32.totalorder %s464, %s465
    %p474 = scmp.eq.s32.totalorder %s30, 0
    %p475 = por %p473, %p474
    %p476 = scmp.ne.s32.totalorder %s464, %s465
    %p477 = scmp.eq.s32.totalorder %s31, 3
    %p478 = por %p476, %p477
    %p480 = scmp.ne.s32.totalorder %s465, %s479
    %p481 = scmp.eq.s32.totalorder %s31, 0
    %p482 = por %p480, %p481
    %s484 = sadd.s32 %s483, 1
    %p487 = scmp.eq.s32.totalorder %s25, 3
    %p488 = scmp.ne.s32.totalorder %s483, %s485
    %p489 = scmp.eq.s32.totalorder %s25, 0
    %p490 = por %p488, %p489
    %p491 = scmp.ne.s32.totalorder %s483, %s485
    %p492 = scmp.eq.s32.totalorder %s30, 3
    %p493 = por %p491, %p492
    %p494 = scmp.ne.s32.totalorder %s485, %s486
    %p495 = scmp.eq.s32.totalorder %s30, 0
    %p496 = por %p494, %p495
    %p497 = scmp.ne.s32.totalorder %s485, %s486
    %p498 = scmp.eq.s32.totalorder %s31, 3
    %p499 = por %p497, %p498
    %p501 = scmp.ne.s32.totalorder %s486, %s500
    %p502 = scmp.eq.s32.totalorder %s31, 0
    %p503 = por %p501, %p502
    %s504 = ssub.s32 %s32, %s44
    %p505 = scmp.eq.s32.totalorder %s504, 0
    %s507 = sadd.s32 %s506, 1
    %s508 = scalar_select %p505, %s506, %s507
    %p511 = pneg %p505
    %p512 = scmp.eq.s32.totalorder %s25, 3
    %p513 = por %p511, %p512
    %p514 = scmp.ne.s32.totalorder %s506, %s509
    %p515 = scmp.eq.s32.totalorder %s25, 0
    %p516 = por %p514, %p515
    %p517 = scmp.ne.s32.totalorder %s506, %s509
    %p518 = scmp.eq.s32.totalorder %s30, 3
    %p519 = por %p517, %p518
    %p520 = scmp.ne.s32.totalorder %s509, %s510
    %p521 = scmp.eq.s32.totalorder %s30, 0
    %p522 = por %p520, %p521
    %p523 = scmp.ne.s32.totalorder %s509, %s510
    %p524 = scmp.eq.s32.totalorder %s31, 3
    %p525 = por %p523, %p524
    %p527 = scmp.ne.s32.totalorder %s510, %s526
    %p528 = scmp.eq.s32.totalorder %s31, 0
    %p529 = por %p527, %p528
    %p530 = scmp.le.s32.totalorder 1, %s25
    %p531 = scmp.lt.s32.totalorder %s25, 5
    %p532 = pnand %p530, %p531
    %p533 = pneg %p532
    // Predicated region
    $region9: #{encoder_forward.1} parent=5 // pred_check
      _
    $region10: #{encoder_forward.1} parent=5 // pred_check_branch
      %535 = sbr.rel (%p532) target = $region12
    $region11: #{encoder_forward.1} parent=5 // pred_region
      %s536 = ssub.s32 %s25, 1
      // Predicated region
      $region13: #{encoder_forward.1} parent=11 // pred_check
        %p537 = pneg %p84
      $region14: #{encoder_forward.1} parent=11 // pred_check_branch
        %539 = sbr.rel (%p537) target = $region16
      $region15: #{encoder_forward.1} parent=11 // pred_region
        _
      $region16: #{encoder_forward.1} parent=11 // pred_fallthru
        _
      // Predicated region
      $region17: #{encoder_forward.1} parent=11 // pred_check
        %p540 = pneg %p105
      $region18: #{encoder_forward.1} parent=11 // pred_check_branch
        %542 = sbr.rel (%p540) target = $region20
      $region19: #{encoder_forward.1} parent=11 // pred_region
        _
      $region20: #{encoder_forward.1} parent=11 // pred_fallthru
        _
      // Predicated region
      $region21: #{encoder_forward.1} parent=11 // pred_check
        %p543 = pneg %p126
      $region22: #{encoder_forward.1} parent=11 // pred_check_branch
        %545 = sbr.rel (%p543) target = $region24
      $region23: #{encoder_forward.1} parent=11 // pred_region
        _
      $region24: #{encoder_forward.1} parent=11 // pred_fallthru
        _
      // Predicated region
      $region25: #{encoder_forward.1} parent=11 // pred_check
        %p546 = pneg %p433
      $region26: #{encoder_forward.1} parent=11 // pred_check_branch
        %548 = sbr.rel (%p546) target = $region28
      $region27: #{encoder_forward.1} parent=11 // pred_region
        _
      $region28: #{encoder_forward.1} parent=11 // pred_fallthru
        _
      // Predicated region
      $region29: #{encoder_forward.1} parent=11 // pred_check
        %p549 = pneg %p454
      $region30: #{encoder_forward.1} parent=11 // pred_check_branch
        %551 = sbr.rel (%p549) target = $region32
      $region31: #{encoder_forward.1} parent=11 // pred_region
        _
      $region32: #{encoder_forward.1} parent=11 // pred_fallthru
        _
      // Predicated region
      $region33: #{encoder_forward.1} parent=11 // pred_check
        %p552 = pneg %p475
      $region34: #{encoder_forward.1} parent=11 // pred_check_branch
        %554 = sbr.rel (%p552) target = $region36
      $region35: #{encoder_forward.1} parent=11 // pred_region
        _
      $region36: #{encoder_forward.1} parent=11 // pred_fallthru
        _
      // Predicated region
      $region37: #{encoder_forward.1} parent=11 // pred_check
        %p555 = pneg %p496
      $region38: #{encoder_forward.1} parent=11 // pred_check_branch
        %557 = sbr.rel (%p555) target = $region40
      $region39: #{encoder_forward.1} parent=11 // pred_region
        _
      $region40: #{encoder_forward.1} parent=11 // pred_fallthru
        _
    $region12: #{encoder_forward.1} parent=5 // pred_fallthru
      _
    %p558 = scmp.lt.s32.totalorder %s25, 4
    // Predicated region
    $region41: #{encoder_forward.1} parent=5 // pred_check
      %p559 = pneg %p558
    $region42: #{encoder_forward.1} parent=5 // pred_check_branch
      %561 = sbr.rel (%p559) target = $region44
    $region43: #{encoder_forward.1} parent=5 // pred_region
      // Predicated region
      $region45: #{encoder_forward.1} parent=43 // pred_check
        %p562 = pneg %p57
      $region46: #{encoder_forward.1} parent=43 // pred_check_branch
        %564 = sbr.rel (%p562) target = $region48
      $region47: #{encoder_forward.1} parent=43 // pred_region
        %p565 = scmp.lt.s32.totalorder %s32, 1
        %s566 = scalar_select %p565, %s32, 1
        %s567 = smul.addr %s566, 2
        %s568 = smul.addr %s567, 8
        %s569 = scalar_lea.vmem %s0, %s568
      $region48: #{encoder_forward.1} parent=43 // pred_fallthru
        _
      // Predicated region
      $region49: #{encoder_forward.1} parent=43 // pred_check
        %p570 = pneg %p146
      $region50: #{encoder_forward.1} parent=43 // pred_check_branch
        %572 = sbr.rel (%p570) target = $region52
      $region51: #{encoder_forward.1} parent=43 // pred_region
        %p573 = scmp.lt.s32.totalorder %s33, 1
        %s574 = scalar_select %p573, %s33, 1
        %s575 = scalar_lea.vmem %s4, %s574
      $region52: #{encoder_forward.1} parent=43 // pred_fallthru
        _
      // Predicated region
      $region53: #{encoder_forward.1} parent=43 // pred_check
        %p576 = pneg %p172
      $region54: #{encoder_forward.1} parent=43 // pred_check_branch
        %578 = sbr.rel (%p576) target = $region56
      $region55: #{encoder_forward.1} parent=43 // pred_region
        %p579 = scmp.lt.s32.totalorder %s33, 1
        %s580 = scalar_select %p579, %s33, 1
        %s581 = scalar_lea.vmem %s5, %s580
      $region56: #{encoder_forward.1} parent=43 // pred_fallthru
        _
      // Predicated region
      $region57: #{encoder_forward.1} parent=43 // pred_check
        %p582 = pneg %p198
      $region58: #{encoder_forward.1} parent=43 // pred_check_branch
        %584 = sbr.rel (%p582) target = $region60
      $region59: #{encoder_forward.1} parent=43 // pred_region
        %p585 = scmp.lt.s32.totalorder %s33, 1
        %s586 = scalar_select %p585, %s33, 1
        %s587 = smul.addr %s586, 4
        %s588 = smul.addr %s587, 8
        %s589 = scalar_lea.vmem %s6, %s588
      $region60: #{encoder_forward.1} parent=43 // pred_fallthru
        _
      // Predicated region
      $region61: #{encoder_forward.1} parent=43 // pred_check
        %p590 = pneg %p224
      $region62: #{encoder_forward.1} parent=43 // pred_check_branch
        %592 = sbr.rel (%p590) target = $region64
      $region63: #{encoder_forward.1} parent=43 // pred_region
        %p593 = scmp.lt.s32.totalorder %s33, 1
        %s594 = scalar_select %p593, %s33, 1
        %s595 = smul.addr %s594, 4
        %s596 = smul.addr %s595, 8
        %s597 = scalar_lea.vmem %s7, %s596
      $region64: #{encoder_forward.1} parent=43 // pred_fallthru
        _
      // Predicated region
      $region65: #{encoder_forward.1} parent=43 // pred_check
        %p598 = pneg %p250
      $region66: #{encoder_forward.1} parent=43 // pred_check_branch
        %600 = sbr.rel (%p598) target = $region68
      $region67: #{encoder_forward.1} parent=43 // pred_region
        %p601 = scmp.lt.s32.totalorder %s33, 1
        %s602 = scalar_select %p601, %s33, 1
        %s603 = scalar_lea.vmem %s8, %s602
      $region68: #{encoder_forward.1} parent=43 // pred_fallthru
        _
      // Predicated region
      $region69: #{encoder_forward.1} parent=43 // pred_check
        %p604 = pneg %p276
      $region70: #{encoder_forward.1} parent=43 // pred_check_branch
        %606 = sbr.rel (%p604) target = $region72
      $region71: #{encoder_forward.1} parent=43 // pred_region
        %p607 = scmp.lt.s32.totalorder %s33, 1
        %s608 = scalar_select %p607, %s33, 1
        %s609 = scalar_lea.vmem %s9, %s608
      $region72: #{encoder_forward.1} parent=43 // pred_fallthru
        _
      // Predicated region
      $region73: #{encoder_forward.1} parent=43 // pred_check
        %p610 = pneg %p302
      $region74: #{encoder_forward.1} parent=43 // pred_check_branch
        %612 = sbr.rel (%p610) target = $region76
      $region75: #{encoder_forward.1} parent=43 // pred_region
        %p613 = scmp.lt.s32.totalorder %s33, 1
        %s614 = scalar_select %p613, %s33, 1
        %s615 = scalar_lea.vmem %s10, %s614
      $region76: #{encoder_forward.1} parent=43 // pred_fallthru
        _
      // Predicated region
      $region77: #{encoder_forward.1} parent=43 // pred_check
        %p616 = pneg %p328
      $region78: #{encoder_forward.1} parent=43 // pred_check_branch
        %618 = sbr.rel (%p616) target = $region80
      $region79: #{encoder_forward.1} parent=43 // pred_region
        %p619 = scmp.lt.s32.totalorder %s33, 1
        %s620 = scalar_select %p619, %s33, 1
        %s621 = smul.addr %s620, 4
        %s622 = smul.addr %s621, 8
        %s623 = scalar_lea.vmem %s11, %s622
      $region80: #{encoder_forward.1} parent=43 // pred_fallthru
        _
      // Predicated region
      $region81: #{encoder_forward.1} parent=43 // pred_check
        %p624 = pneg %p354
      $region82: #{encoder_forward.1} parent=43 // pred_check_branch
        %626 = sbr.rel (%p624) target = $region84
      $region83: #{encoder_forward.1} parent=43 // pred_region
        %p627 = scmp.lt.s32.totalorder %s33, 1
        %s628 = scalar_select %p627, %s33, 1
        %s629 = scalar_lea.vmem %s12, %s628
      $region84: #{encoder_forward.1} parent=43 // pred_fallthru
        _
      // Predicated region
      $region85: #{encoder_forward.1} parent=43 // pred_check
        %p630 = pneg %p380
      $region86: #{encoder_forward.1} parent=43 // pred_check_branch
        %632 = sbr.rel (%p630) target = $region88
      $region87: #{encoder_forward.1} parent=43 // pred_region
        %p633 = scmp.lt.s32.totalorder %s33, 1
        %s634 = scalar_select %p633, %s33, 1
        %s635 = smul.addr %s634, 8
        %s636 = smul.addr %s635, 8
        %s637 = scalar_lea.vmem %s13, %s636
      $region88: #{encoder_forward.1} parent=43 // pred_fallthru
        _
      // Predicated region
      $region89: #{encoder_forward.1} parent=43 // pred_check
        %p638 = pneg %p406
      $region90: #{encoder_forward.1} parent=43 // pred_check_branch
        %640 = sbr.rel (%p638) target = $region92
      $region91: #{encoder_forward.1} parent=43 // pred_region
        %p641 = scmp.lt.s32.totalorder %s33, 1
        %s642 = scalar_select %p641, %s33, 1
        %s643 = scalar_lea.vmem %s14, %s642
      $region92: #{encoder_forward.1} parent=43 // pred_fallthru
        _
    $region44: #{encoder_forward.1} parent=5 // pred_fallthru
      _
    %p644 = scmp.le.s32.totalorder 1, %s25
    %p645 = scmp.lt.s32.totalorder %s25, 5
    %p646 = pnand %p644, %p645
    %p647 = pneg %p646
    // Predicated region
    $region93: #{encoder_forward.1} parent=5 // pred_check
      _
    $region94: #{encoder_forward.1} parent=5 // pred_check_branch
      %649 = sbr.rel (%p646) target = $region96
    $region95: #{encoder_forward.1} parent=5 // pred_region
      %s650 = ssub.s32 %s25, 1
      %p651 = scmp.lt.s32.totalorder %s34, 1
      %s652 = scalar_select %p651, %s34, 1
      %s653 = smul.addr %s652, 2
      %s654 = smul.addr %s653, 8
      %s655 = scalar_lea.vmem %s0, %s654
      %p656 = pneg %p63
      %p657 = pneg %p60
      %p658 = pneg %p84
      %p659 = pneg %p81
      %p660 = pneg %p105
      %p661 = pneg %p102
      %p662 = pneg %p126
      %p663 = pneg %p123
      %p664 = scmp.lt.s32.totalorder %s35, 1
      %s665 = scalar_select %p664, %s35, 1
      %s666 = scalar_lea.vmem %s4, %s665
      %p667 = pneg %p152
      %p668 = pneg %p149
      %p669 = scmp.lt.s32.totalorder %s35, 1
      %s670 = scalar_select %p669, %s35, 1
      %s671 = scalar_lea.vmem %s5, %s670
      %p672 = pneg %p178
      %p673 = pneg %p175
      %p674 = scmp.lt.s32.totalorder %s35, 1
      %s675 = scalar_select %p674, %s35, 1
      %s676 = smul.addr %s675, 4
      %s677 = smul.addr %s676, 8
      %s678 = scalar_lea.vmem %s6, %s677
      %p679 = pneg %p204
      %p680 = pneg %p201
      %p681 = scmp.lt.s32.totalorder %s35, 1
      %s682 = scalar_select %p681, %s35, 1
      %s683 = smul.addr %s682, 4
      %s684 = smul.addr %s683, 8
      %s685 = scalar_lea.vmem %s7, %s684
      %p686 = pneg %p230
      %p687 = pneg %p227
      %p688 = scmp.lt.s32.totalorder %s35, 1
      %s689 = scalar_select %p688, %s35, 1
      %s690 = scalar_lea.vmem %s8, %s689
      %p691 = pneg %p256
      %p692 = pneg %p253
      %p693 = scmp.lt.s32.totalorder %s35, 1
      %s694 = scalar_select %p693, %s35, 1
      %s695 = scalar_lea.vmem %s9, %s694
      %p696 = pneg %p282
      %p697 = pneg %p279
      %p698 = scmp.lt.s32.totalorder %s35, 1
      %s699 = scalar_select %p698, %s35, 1
      %s700 = scalar_lea.vmem %s10, %s699
      %p701 = pneg %p308
      %p702 = pneg %p305
      %p703 = scmp.lt.s32.totalorder %s35, 1
      %s704 = scalar_select %p703, %s35, 1
      %s705 = smul.addr %s704, 4
      %s706 = smul.addr %s705, 8
      %s707 = scalar_lea.vmem %s11, %s706
      %p708 = pneg %p334
      %p709 = pneg %p331
      %p710 = scmp.lt.s32.totalorder %s35, 1
      %s711 = scalar_select %p710, %s35, 1
      %s712 = scalar_lea.vmem %s12, %s711
      %p713 = pneg %p360
      %p714 = pneg %p357
      %p715 = scmp.lt.s32.totalorder %s35, 1
      %s716 = scalar_select %p715, %s35, 1
      %s717 = smul.addr %s716, 8
      %s718 = smul.addr %s717, 8
      %s719 = scalar_lea.vmem %s13, %s718
      %p720 = pneg %p386
      %p721 = pneg %p383
      %p722 = scmp.lt.s32.totalorder %s35, 1
      %s723 = scalar_select %p722, %s35, 1
      %s724 = scalar_lea.vmem %s14, %s723
      %p725 = pneg %p412
      %p726 = pneg %p409
      %p727 = pneg %p433
      %p728 = pneg %p430
      %p729 = pneg %p454
      %p730 = pneg %p451
      %p731 = pneg %p475
      %p732 = pneg %p472
      %p733 = pneg %p496
      %p734 = pneg %p493
      %p735 = pneg %p522
      %p736 = pneg %p519
      %p737 = scmp.lt.s32.totalorder %s34, 1
      %s738 = scalar_select %p737, %s34, 1
      %s739 = smul.addr %s738, 2
      %s740 = smul.addr %s739, 8
      %s741 = scalar_lea.vmem %s19, %s740
      %p742 = scmp.lt.s32.totalorder %s34, 1
      %s743 = scalar_select %p742, %s34, 1
      %s744 = smul.addr %s743, 2
      %s745 = smul.addr %s744, 8
      %s746 = scalar_lea.vmem %s0, %s745
      %p747 = scmp.lt.s32.totalorder %s35, 1
      %s748 = scalar_select %p747, %s35, 1
      %s749 = scalar_lea.vmem %s4, %s748
      %p750 = scmp.lt.s32.totalorder %s35, 1
      %s751 = scalar_select %p750, %s35, 1
      %s752 = scalar_lea.vmem %s5, %s751
      %p753 = scmp.lt.s32.totalorder %s35, 1
      %s754 = scalar_select %p753, %s35, 1
      %s755 = smul.addr %s754, 4
      %s756 = smul.addr %s755, 8
      %s757 = scalar_lea.vmem %s6, %s756
      %p758 = scmp.lt.s32.totalorder %s35, 1
      %s759 = scalar_select %p758, %s35, 1
      %s760 = smul.addr %s759, 4
      %s761 = smul.addr %s760, 8
      %s762 = scalar_lea.vmem %s7, %s761
      %p763 = scmp.lt.s32.totalorder %s35, 1
      %s764 = scalar_select %p763, %s35, 1
      %s765 = scalar_lea.vmem %s8, %s764
      %p766 = scmp.lt.s32.totalorder %s35, 1
      %s767 = scalar_select %p766, %s35, 1
      %s768 = scalar_lea.vmem %s9, %s767
      %p769 = scmp.lt.s32.totalorder %s35, 1
      %s770 = scalar_select %p769, %s35, 1
      %s771 = scalar_lea.vmem %s10, %s770
      %p772 = scmp.lt.s32.totalorder %s35, 1
      %s773 = scalar_select %p772, %s35, 1
      %s774 = smul.addr %s773, 4
      %s775 = smul.addr %s774, 8
      %s776 = scalar_lea.vmem %s11, %s775
      %p777 = scmp.lt.s32.totalorder %s35, 1
      %s778 = scalar_select %p777, %s35, 1
      %s779 = scalar_lea.vmem %s12, %s778
      %p780 = scmp.lt.s32.totalorder %s35, 1
      %s781 = scalar_select %p780, %s35, 1
      %s782 = smul.addr %s781, 8
      %s783 = smul.addr %s782, 8
      %s784 = scalar_lea.vmem %s13, %s783
      %p785 = scmp.lt.s32.totalorder %s35, 1
      %s786 = scalar_select %p785, %s35, 1
      %s787 = scalar_lea.vmem %s14, %s786
      %p788 = scmp.lt.s32.totalorder %s34, 1
      %s789 = scalar_select %p788, %s34, 1
      %s790 = smul.addr %s789, 2
      %s791 = smul.addr %s790, 8
      %s792 = scalar_lea.vmem %s19, %s791
      %p793 = scmp.eq.s32.totalorder %s35, 0
      // Predicated region
      $region97: #{encoder_forward.1} parent=95 // pred_check
        %p794 = pneg %p793
      $region98: #{encoder_forward.1} parent=95 // pred_check_branch
        %796 = sbr.rel (%p794) target = $region100
      $region99: #{encoder_forward.1} parent=95 // pred_region
        %v797 = vld [vmem:[%s746] sm:$0xff]
        %v798 = vld [vmem:[%s746 + $0x8] sm:$0xff]
        %v799 = vld [vmem:[%s1] sm:$0xff]
        %v800 = vld [vmem:[%s1 + $0x8] sm:$0xff]
        %v801 = vld [vmem:[%s1 + $0x10] sm:$0xff]
        %v802 = vld [vmem:[%s1 + $0x18] sm:$0xff]
        %v803 = vld [vmem:[%s1 + $0x20] sm:$0xff]
        %v804 = vld [vmem:[%s1 + $0x28] sm:$0xff]
        %v805 = vld [vmem:[%s2] sm:$0x1]
        %v807 = vperm.slane %v805, 0
        %vm809 = vcmask 392192
        %v811 = vsel %vm809, %v797, 0
        %v814 = vsel %vm809, %v798, 0
        %816 = vmatpush.msra.mxu0 0.0
        %817 = vmatpush.msra.mxu0 0.0
        %818 = vmatpush.msra.mxu0 0.0
        %819 = vmatpush.msra.mxu0 0.0
        %820 = vmatpush.msra.mxu0 0.0
        %821 = vmatpush.msra.mxu0 0.0
        %822 = vmatpush.msra.mxu0 0.0
        %823 = vmatpush.msra.mxu0 0.0
        %824 = vmatpush.msra.mxu0 0.0
        %825 = vmatpush.msra.mxu0 0.0
        %826 = vmatpush.msra.mxu0 %v804
        %827 = vmatpush.msra.mxu0 %v803
        %828 = vmatpush.msra.mxu0 %v802
        %829 = vmatpush.msra.mxu0 %v801
        %830 = vmatpush.msra.mxu0 %v800
        %831 = vmatpush.msra.mxu0 %v799
        %832 = vmatmul.f32.gmra.mxu0 %v811
        %v833 = vpop.f32.mrf.mxu0
        %v834 = vadd.f32 %v807, %v833
        %835 = vmatmul.f32.gmra.mxu0 %v814
        %v836 = vpop.f32.mrf.mxu0
        %v837 = vadd.f32 %v807, %v836
        %838 = vdwg.mxu0
        %v839 = vld [vmem:[%s3] sm:$0xff]
        %v840 = vld [vmem:[%s3 + $0x8] sm:$0xff]
        %v841 = vadd.f32 %v834, %v839
        %v842 = vadd.f32 %v837, %v840
        %vm843 = vcmask 261120
        %844 = vst.msk [vmem:[#allocation2] sm:$0xff] %vm843, %v841
        %845 = vst.msk [vmem:[#allocation2 + $0x8] sm:$0xff] %vm843, %v842
      $region100: #{encoder_forward.1} parent=95 // pred_fallthru
        _
      %v846 = vld [vmem:[#allocation2] sm:$0xff]
      %v847 = vld [vmem:[#allocation2 + $0x8] sm:$0xff]
      %v848 = vld [vmem:[%s749] sm:$0x1]
      %v849 = vld [vmem:[%s752] sm:$0x1]
      %vm850 = vcmask 261120
      %v851 = vsel %vm850, %v846, 0.0
      %852 = vadd.xlane.f32.xlu0 %v851
      %v853 = vpop.xlane.xlu0 %852
      %v854 = vsel %vm850, %v847, 0.0
      %855 = vadd.xlane.f32.xlu0 %v854
      %v856 = vpop.xlane.xlu0 %855
      %v857 = vrcp.pop 32.0
      %v858 = vmul.f32 32.0, %v857
      %v859 = vsub.f32 1.0, %v858
      %v860 = vmul.f32 %v857, %v859
      %v861 = vadd.f32 %v857, %v860
      %vm862 = vweird.f32 %v857
      %v863 = vsel %vm862, %v857, %v861
      %v864 = vmul.f32 %v853, %v863
      %v865 = vmul.f32 %v856, %v863
      %v866 = vsub.f32 %v846, %v864
      %v867 = vsub.f32 %v847, %v865
      %v868 = vmul.f32 %v866, %v866
      %v869 = vmul.f32 %v867, %v867
      %v870 = vsel %vm850, %v868, 0.0
      %871 = vadd.xlane.f32.xlu0 %v870
      %v872 = vpop.xlane.xlu0 %871
      %v873 = vsel %vm850, %v869, 0.0
      %874 = vadd.xlane.f32.xlu0 %v873
      %v875 = vpop.xlane.xlu0 %874
      %v876 = vmul.f32 %v872, %v863
      %v877 = vmul.f32 %v875, %v863
      %v878 = vadd.f32 %v876, 1e-05
      %v879 = vadd.f32 %v877, 1e-05
      %v880 = vrsqrt.pop %v878
      %v881 = vmul.f32 %v880, %v878
      %v882 = vmul.f32 %v881, %v880
      %v883 = vmul.f32 0.5, %v882
      %v884 = vsub.f32 1.5, %v883
      %v885 = vmul.f32 %v880, %v884
      %vm886 = vweird.f32 %v878
      %vm887 = vweird.f32 %v880
      %vm888 = vmor %vm886, %vm887
      %v889 = vsel %vm888, %v880, %v885
      %v890 = vrsqrt.pop %v879
      %v891 = vmul.f32 %v890, %v879
      %v892 = vmul.f32 %v891, %v890
      %v893 = vmul.f32 0.5, %v892
      %v894 = vsub.f32 1.5, %v893
      %v895 = vmul.f32 %v890, %v894
      %vm896 = vweird.f32 %v879
      %vm897 = vweird.f32 %v890
      %vm898 = vmor %vm896, %vm897
      %v899 = vsel %vm898, %v890, %v895
      %v900 = vmul.f32 %v866, %v889
      %v901 = vmul.f32 %v867, %v899
      %v903 = vperm.slane %v848, 0
      %v905 = vmul.f32 %v900, %v903
      %v906 = vmul.f32 %v901, %v903
      %v908 = vperm.slane %v849, 0
      %v910 = vadd.f32 %v905, %v908
      %v911 = vadd.f32 %v906, %v908
      %v912 = vld [vmem:[%s757] sm:$0xff]
      %v913 = vld [vmem:[%s757 + $0x8] sm:$0xff]
      %v914 = vld [vmem:[%s757 + $0x10] sm:$0xff]
      %v915 = vld [vmem:[%s757 + $0x18] sm:$0xff]
      %v917 = vsel %vm850, %v910, 0
      %v920 = vsel %vm850, %v911, 0
      %922 = vmatpush.msra.mxu0 0.0
      %923 = vmatpush.msra.mxu0 0.0
      %924 = vmatpush.msra.mxu0 0.0
      %925 = vmatpush.msra.mxu0 0.0
      %926 = vmatpush.msra.mxu0 0.0
      %927 = vmatpush.msra.mxu0 0.0
      %928 = vmatpush.msra.mxu0 0.0
      %929 = vmatpush.msra.mxu0 0.0
      %930 = vmatpush.msra.mxu0 0.0
      %931 = vmatpush.msra.mxu0 0.0
      %932 = vmatpush.msra.mxu0 0.0
      %933 = vmatpush.msra.mxu0 0.0
      %934 = vmatpush.msra.mxu0 %v915
      %935 = vmatpush.msra.mxu0 %v914
      %936 = vmatpush.msra.mxu0 %v913
      %937 = vmatpush.msra.mxu0 %v912
      %938 = vmatmul.f32.gmra.mxu0 %v917
      %v939 = vpop.f32.mrf.mxu0
      %v940 = vadd.f32 0.0, %v939
      %941 = vmatmul.f32.gmra.mxu0 %v920
      %v942 = vpop.f32.mrf.mxu0
      %v943 = vadd.f32 0.0, %v942
      %944 = vdwg.mxu0
      %947 = vrot.lane.b32.xlu0 %v940, 96
      %v948 = vpop.permute.xlu0 %947
      %949 = vrot.lane.b32.xlu0 %v943, 96
      %v950 = vpop.permute.xlu0 %949
      %vm951 = vcmask 130048
      %v952 = vsel %vm951, %v940, 0
      %v954 = vsel %vm951, %v943, 0
      %v956 = vsel %vm951, %v948, 0
      %v958 = vsel %vm951, %v950, 0
      %960 = vmatpush.xpose.msra.mxu0 0.0
      %961 = vmatpush.xpose.msra.mxu0 0.0
      %962 = vmatpush.xpose.msra.mxu0 0.0
      %963 = vmatpush.xpose.msra.mxu0 0.0
      %964 = vmatpush.xpose.msra.mxu0 0.0
      %965 = vmatpush.xpose.msra.mxu0 0.0
      %966 = vmatpush.xpose.msra.mxu0 0.0
      %967 = vmatpush.xpose.msra.mxu0 0.0
      %968 = vmatpush.xpose.msra.mxu0 0.0
      %969 = vmatpush.xpose.msra.mxu0 0.0
      %970 = vmatpush.xpose.msra.mxu0 0.0
      %971 = vmatpush.xpose.msra.mxu0 0.0
      %972 = vmatpush.xpose.msra.mxu0 0.0
      %973 = vmatpush.xpose.msra.mxu0 0.0
      %974 = vmatpush.xpose.msra.mxu0 %v958
      %975 = vmatpush.xpose.msra.mxu0 %v956
      %976 = vmatmul.f32.gmra.mxu0 %v952
      %v977 = vpop.f32.mrf.mxu0
      %v978 = vadd.f32 0.0, %v977
      %979 = vmatmul.f32.gmra.mxu0 %v954
      %v980 = vpop.f32.mrf.mxu0
      %v981 = vadd.f32 0.0, %v980
      %982 = vdwg.mxu0
      %v983 = vsel %vm951, %v978, -inf
      %984 = vmax.xlane.f32.xlu0 %v983
      %v985 = vpop.xlane.xlu0 %984
      %v986 = vsel %vm951, %v981, -inf
      %987 = vmax.xlane.f32.xlu0 %v986
      %v988 = vpop.xlane.xlu0 %987
      %v989 = vsub.f32 %v978, %v985
      %v990 = vsub.f32 %v981, %v988
      %v991 = vmul.f32 %v989, 1.442695
      %v992 = vpow.pop %v991
      %v993 = vmul.f32 %v990, 1.442695
      %v994 = vpow.pop %v993
      %v995 = vsel %vm951, %v992, 0.0
      %996 = vadd.xlane.f32.xlu0 %v995
      %v997 = vpop.xlane.xlu0 %996
      %v998 = vsel %vm951, %v994, 0.0
      %999 = vadd.xlane.f32.xlu0 %v998
      %v1000 = vpop.xlane.xlu0 %999
      %v1001 = vrcp.pop %v997
      %v1002 = vrcp.pop %v1000
      %v1003 = vmul.f32 %v992, %v1001
      %v1004 = vmul.f32 %v994, %v1002
      %1005 = vrot.lane.b32.xlu0 %v940, 64
      %v1006 = vpop.permute.xlu0 %1005
      %1007 = vrot.lane.b32.xlu0 %v943, 64
      %v1008 = vpop.permute.xlu0 %1007
      %v1012 = vsel %vm951, %v1003, 0
      %v1015 = vsel %vm951, %v1004, 0
      %1017 = vmatpush.msra.mxu0 0.0
      %1018 = vmatpush.msra.mxu0 0.0
      %1019 = vmatpush.msra.mxu0 0.0
      %1020 = vmatpush.msra.mxu0 0.0
      %1021 = vmatpush.msra.mxu0 0.0
      %1022 = vmatpush.msra.mxu0 0.0
      %1023 = vmatpush.msra.mxu0 0.0
      %1024 = vmatpush.msra.mxu0 0.0
      %1025 = vmatpush.msra.mxu0 0.0
      %1026 = vmatpush.msra.mxu0 0.0
      %1027 = vmatpush.msra.mxu0 0.0
      %1028 = vmatpush.msra.mxu0 0.0
      %1029 = vmatpush.msra.mxu0 0.0
      %1030 = vmatpush.msra.mxu0 0.0
      %1031 = vmatpush.msra.mxu0 %v1008
      %1032 = vmatpush.msra.mxu0 %v1006
      %1033 = vmatmul.f32.gmra.mxu0 %v1012
      %v1034 = vpop.f32.mrf.mxu0
      %v1035 = vadd.f32 0.0, %v1034
      %1036 = vmatmul.f32.gmra.mxu0 %v1015
      %v1037 = vpop.f32.mrf.mxu0
      %v1038 = vadd.f32 0.0, %v1037
      %1039 = vdwg.mxu0
      %1040 = vrot.lane.b32.xlu0 %v940, 112
      %v1041 = vpop.permute.xlu0 %1040
      %1042 = vrot.lane.b32.xlu0 %v943, 112
      %v1043 = vpop.permute.xlu0 %1042
      %1044 = vrot.lane.b32.xlu0 %v940, 80
      %v1045 = vpop.permute.xlu0 %1044
      %1046 = vrot.lane.b32.xlu0 %v943, 80
      %v1047 = vpop.permute.xlu0 %1046
      %v1048 = vsel %vm951, %v1041, 0
      %v1050 = vsel %vm951, %v1043, 0
      %v1052 = vsel %vm951, %v1045, 0
      %v1054 = vsel %vm951, %v1047, 0
      %1056 = vmatpush.xpose.msra.mxu0 0.0
      %1057 = vmatpush.xpose.msra.mxu0 0.0
      %1058 = vmatpush.xpose.msra.mxu0 0.0
      %1059 = vmatpush.xpose.msra.mxu0 0.0
      %1060 = vmatpush.xpose.msra.mxu0 0.0
      %1061 = vmatpush.xpose.msra.mxu0 0.0
      %1062 = vmatpush.xpose.msra.mxu0 0.0
      %1063 = vmatpush.xpose.msra.mxu0 0.0
      %1064 = vmatpush.xpose.msra.mxu0 0.0
      %1065 = vmatpush.xpose.msra.mxu0 0.0
      %1066 = vmatpush.xpose.msra.mxu0 0.0
      %1067 = vmatpush.xpose.msra.mxu0 0.0
      %1068 = vmatpush.xpose.msra.mxu0 0.0
      %1069 = vmatpush.xpose.msra.mxu0 0.0
      %1070 = vmatpush.xpose.msra.mxu0 %v1054
      %1071 = vmatpush.xpose.msra.mxu0 %v1052
      %1072 = vmatmul.f32.gmra.mxu0 %v1048
      %v1073 = vpop.f32.mrf.mxu0
      %v1074 = vadd.f32 0.0, %v1073
      %1075 = vmatmul.f32.gmra.mxu0 %v1050
      %v1076 = vpop.f32.mrf.mxu0
      %v1077 = vadd.f32 0.0, %v1076
      %1078 = vdwg.mxu0
      %v1079 = vsel %vm951, %v1074, -inf
      %1080 = vmax.xlane.f32.xlu0 %v1079
      %v1081 = vpop.xlane.xlu0 %1080
      %v1082 = vsel %vm951, %v1077, -inf
      %1083 = vmax.xlane.f32.xlu0 %v1082
      %v1084 = vpop.xlane.xlu0 %1083
      %v1085 = vsub.f32 %v1074, %v1081
      %v1086 = vsub.f32 %v1077, %v1084
      %v1087 = vmul.f32 %v1085, 1.442695
      %v1088 = vpow.pop %v1087
      %v1089 = vmul.f32 %v1086, 1.442695
      %v1090 = vpow.pop %v1089
      %v1091 = vsel %vm951, %v1088, 0.0
      %1092 = vadd.xlane.f32.xlu0 %v1091
      %v1093 = vpop.xlane.xlu0 %1092
      %v1094 = vsel %vm951, %v1090, 0.0
      %1095 = vadd.xlane.f32.xlu0 %v1094
      %v1096 = vpop.xlane.xlu0 %1095
      %v1097 = vrcp.pop %v1093
      %v1098 = vrcp.pop %v1096
      %v1099 = vmul.f32 %v1088, %v1097
      %v1100 = vmul.f32 %v1090, %v1098
      %1101 = vrot.lane.b32.xlu0 %v940, 48
      %v1102 = vpop.permute.xlu0 %1101
      %1103 = vrot.lane.b32.xlu0 %v943, 48
      %v1104 = vpop.permute.xlu0 %1103
      %v1108 = vsel %vm951, %v1099, 0
      %v1111 = vsel %vm951, %v1100, 0
      %1113 = vmatpush.msra.mxu0 0.0
      %1114 = vmatpush.msra.mxu0 0.0
      %1115 = vmatpush.msra.mxu0 0.0
      %1116 = vmatpush.msra.mxu0 0.0
      %1117 = vmatpush.msra.mxu0 0.0
      %1118 = vmatpush.msra.mxu0 0.0
      %1119 = vmatpush.msra.mxu0 0.0
      %1120 = vmatpush.msra.mxu0 0.0
      %1121 = vmatpush.msra.mxu0 0.0
      %1122 = vmatpush.msra.mxu0 0.0
      %1123 = vmatpush.msra.mxu0 0.0
      %1124 = vmatpush.msra.mxu0 0.0
      %1125 = vmatpush.msra.mxu0 0.0
      %1126 = vmatpush.msra.mxu0 0.0
      %1127 = vmatpush.msra.mxu0 %v1104
      %1128 = vmatpush.msra.mxu0 %v1102
      %1129 = vmatmul.f32.gmra.mxu0 %v1108
      %v1130 = vpop.f32.mrf.mxu0
      %v1131 = vadd.f32 0.0, %v1130
      %1132 = vmatmul.f32.gmra.mxu0 %v1111
      %v1133 = vpop.f32.mrf.mxu0
      %v1134 = vadd.f32 0.0, %v1133
      %1135 = vdwg.mxu0
      %1138 = vrot.lane.b32.xlu0 %v1131, 16
      %v1139 = vpop.permute.xlu0 %1138
      %1140 = vrot.lane.b32.xlu0 %v1134, 16
      %v1141 = vpop.permute.xlu0 %1140
      %v1144 = vsel %vm951, %v1035, %v1139
      %v1145 = vsel %vm951, %v1038, %v1141
      %v1146 = vld [vmem:[%s762] sm:$0xff]
      %v1147 = vld [vmem:[%s762 + $0x8] sm:$0xff]
      %v1148 = vld [vmem:[%s762 + $0x10] sm:$0xff]
      %v1149 = vld [vmem:[%s762 + $0x18] sm:$0xff]
      %v1151 = vsel %vm850, %v1144, 0
      %v1154 = vsel %vm850, %v1145, 0
      %1156 = vmatpush.msra.mxu0 0.0
      %1157 = vmatpush.msra.mxu0 0.0
      %1158 = vmatpush.msra.mxu0 0.0
      %1159 = vmatpush.msra.mxu0 0.0
      %1160 = vmatpush.msra.mxu0 0.0
      %1161 = vmatpush.msra.mxu0 0.0
      %1162 = vmatpush.msra.mxu0 0.0
      %1163 = vmatpush.msra.mxu0 0.0
      %1164 = vmatpush.msra.mxu0 0.0
      %1165 = vmatpush.msra.mxu0 0.0
      %1166 = vmatpush.msra.mxu0 0.0
      %1167 = vmatpush.msra.mxu0 0.0
      %1168 = vmatpush.msra.mxu0 %v1149
      %1169 = vmatpush.msra.mxu0 %v1148
      %1170 = vmatpush.msra.mxu0 %v1147
      %1171 = vmatpush.msra.mxu0 %v1146
      %1172 = vmatmul.f32.gmra.mxu0 %v1151
      %v1173 = vpop.f32.mrf.mxu0
      %v1174 = vadd.f32 0.0, %v1173
      %1175 = vmatmul.f32.gmra.mxu0 %v1154
      %v1176 = vpop.f32.mrf.mxu0
      %v1177 = vadd.f32 0.0, %v1176
      %1178 = vdwg.mxu0
      %v1179 = vadd.f32 %v846, %v1174
      %v1180 = vadd.f32 %v847, %v1177
      %v1181 = vld [vmem:[%s765] sm:$0x1]
      %v1183 = vperm.slane %v1181, 0
      %v1185 = vadd.f32 %v1179, %v1183
      %v1186 = vadd.f32 %v1180, %v1183
      %v1187 = vld [vmem:[%s768] sm:$0x1]
      %v1188 = vld [vmem:[%s771] sm:$0x1]
      %v1189 = vsel %vm850, %v1185, 0.0
      %1190 = vadd.xlane.f32.xlu0 %v1189
      %v1191 = vpop.xlane.xlu0 %1190
      %v1192 = vsel %vm850, %v1186, 0.0
      %1193 = vadd.xlane.f32.xlu0 %v1192
      %v1194 = vpop.xlane.xlu0 %1193
      %v1195 = vmul.f32 %v1191, %v863
      %v1196 = vmul.f32 %v1194, %v863
      %v1197 = vsub.f32 %v1185, %v1195
      %v1198 = vsub.f32 %v1186, %v1196
      %v1199 = vmul.f32 %v1197, %v1197
      %v1200 = vmul.f32 %v1198, %v1198
      %v1201 = vsel %vm850, %v1199, 0.0
      %1202 = vadd.xlane.f32.xlu0 %v1201
      %v1203 = vpop.xlane.xlu0 %1202
      %v1204 = vsel %vm850, %v1200, 0.0
      %1205 = vadd.xlane.f32.xlu0 %v1204
      %v1206 = vpop.xlane.xlu0 %1205
      %v1207 = vmul.f32 %v1203, %v863
      %v1208 = vmul.f32 %v1206, %v863
      %v1209 = vadd.f32 %v1207, 1e-05
      %v1210 = vadd.f32 %v1208, 1e-05
      %v1211 = vrsqrt.pop %v1209
      %v1212 = vmul.f32 %v1211, %v1209
      %v1213 = vmul.f32 %v1212, %v1211
      %v1214 = vmul.f32 0.5, %v1213
      %v1215 = vsub.f32 1.5, %v1214
      %v1216 = vmul.f32 %v1211, %v1215
      %vm1217 = vweird.f32 %v1209
      %vm1218 = vweird.f32 %v1211
      %vm1219 = vmor %vm1217, %vm1218
      %v1220 = vsel %vm1219, %v1211, %v1216
      %v1221 = vrsqrt.pop %v1210
      %v1222 = vmul.f32 %v1221, %v1210
      %v1223 = vmul.f32 %v1222, %v1221
      %v1224 = vmul.f32 0.5, %v1223
      %v1225 = vsub.f32 1.5, %v1224
      %v1226 = vmul.f32 %v1221, %v1225
      %vm1227 = vweird.f32 %v1210
      %vm1228 = vweird.f32 %v1221
      %vm1229 = vmor %vm1227, %vm1228
      %v1230 = vsel %vm1229, %v1221, %v1226
      %v1231 = vmul.f32 %v1197, %v1220
      %v1232 = vmul.f32 %v1198, %v1230
      %v1234 = vperm.slane %v1187, 0
      %v1236 = vmul.f32 %v1231, %v1234
      %v1237 = vmul.f32 %v1232, %v1234
      %v1239 = vperm.slane %v1188, 0
      %v1241 = vadd.f32 %v1236, %v1239
      %v1242 = vadd.f32 %v1237, %v1239
      %v1243 = vld [vmem:[%s776] sm:$0xff]
      %v1244 = vld [vmem:[%s776 + $0x8] sm:$0xff]
      %v1245 = vld [vmem:[%s776 + $0x10] sm:$0xff]
      %v1246 = vld [vmem:[%s776 + $0x18] sm:$0xff]
      %v1247 = vld [vmem:[%s779] sm:$0x1]
      %v1249 = vperm.slane %v1247, 0
      %v1252 = vsel %vm850, %v1241, 0
      %v1255 = vsel %vm850, %v1242, 0
      %1257 = vmatpush.msra.mxu0 0.0
      %1258 = vmatpush.msra.mxu0 0.0
      %1259 = vmatpush.msra.mxu0 0.0
      %1260 = vmatpush.msra.mxu0 0.0
      %1261 = vmatpush.msra.mxu0 0.0
      %1262 = vmatpush.msra.mxu0 0.0
      %1263 = vmatpush.msra.mxu0 0.0
      %1264 = vmatpush.msra.mxu0 0.0
      %1265 = vmatpush.msra.mxu0 0.0
      %1266 = vmatpush.msra.mxu0 0.0
      %1267 = vmatpush.msra.mxu0 0.0
      %1268 = vmatpush.msra.mxu0 0.0
      %1269 = vmatpush.msra.mxu0 %v1246
      %1270 = vmatpush.msra.mxu0 %v1245
      %1271 = vmatpush.msra.mxu0 %v1244
      %1272 = vmatpush.msra.mxu0 %v1243
      %1273 = vmatmul.f32.gmra.mxu0 %v1252
      %v1274 = vpop.f32.mrf.mxu0
      %v1275 = vadd.f32 %v1249, %v1274
      %1276 = vmatmul.f32.gmra.mxu0 %v1255
      %v1277 = vpop.f32.mrf.mxu0
      %v1278 = vadd.f32 %v1249, %v1277
      %1279 = vdwg.mxu0
      %v1280 = vmul.f32 %v1275, %v1275
      %v1281 = vmul.f32 %v1278, %v1278
      %v1282 = vmul.f32 %v1275, %v1280
      %v1283 = vmul.f32 %v1278, %v1281
      %v1284 = vmul.f32 %v1282, 0.044715
      %v1285 = vmul.f32 %v1283, 0.044715
      %v1286 = vadd.f32 %v1275, %v1284
      %v1287 = vadd.f32 %v1278, %v1285
      %v1288 = vmul.f32 %v1286, 0.7978846
      %v1289 = vmul.f32 %v1287, 0.7978846
      %v1290 = vtanh.pop %v1288
      %v1291 = vtanh.pop %v1289
      %v1292 = vadd.f32 %v1290, 1.0
      %v1293 = vadd.f32 %v1291, 1.0
      %v1294 = vmul.f32 %v1292, 0.5
      %v1295 = vmul.f32 %v1293, 0.5
      %v1296 = vmul.f32 %v1275, %v1294
      %v1297 = vmul.f32 %v1278, %v1295
      %v1298 = vld [vmem:[%s784] sm:$0xff]
      %v1299 = vld [vmem:[%s784 + $0x8] sm:$0xff]
      %v1300 = vld [vmem:[%s784 + $0x10] sm:$0xff]
      %v1301 = vld [vmem:[%s784 + $0x18] sm:$0xff]
      %v1302 = vld [vmem:[%s784 + $0x20] sm:$0xff]
      %v1303 = vld [vmem:[%s784 + $0x28] sm:$0xff]
      %v1304 = vld [vmem:[%s784 + $0x30] sm:$0xff]
      %v1305 = vld [vmem:[%s784 + $0x38] sm:$0xff]
      %vm1306 = vcmask 523264
      %v1308 = vsel %vm1306, %v1296, 0
      %v1311 = vsel %vm1306, %v1297, 0
      %1313 = vmatpush.msra.mxu0 0.0
      %1314 = vmatpush.msra.mxu0 0.0
      %1315 = vmatpush.msra.mxu0 0.0
      %1316 = vmatpush.msra.mxu0 0.0
      %1317 = vmatpush.msra.mxu0 0.0
      %1318 = vmatpush.msra.mxu0 0.0
      %1319 = vmatpush.msra.mxu0 0.0
      %1320 = vmatpush.msra.mxu0 0.0
      %1321 = vmatpush.msra.mxu0 %v1305
      %1322 = vmatpush.msra.mxu0 %v1304
      %1323 = vmatpush.msra.mxu0 %v1303
      %1324 = vmatpush.msra.mxu0 %v1302
      %1325 = vmatpush.msra.mxu0 %v1301
      %1326 = vmatpush.msra.mxu0 %v1300
      %1327 = vmatpush.msra.mxu0 %v1299
      %1328 = vmatpush.msra.mxu0 %v1298
      %1329 = vmatmul.f32.gmra.mxu0 %v1308
      %v1330 = vpop.f32.mrf.mxu0
      %v1331 = vadd.f32 0.0, %v1330
      %1332 = vmatmul.f32.gmra.mxu0 %v1311
      %v1333 = vpop.f32.mrf.mxu0
      %v1334 = vadd.f32 0.0, %v1333
      %1335 = vdwg.mxu0
      %v1336 = vadd.f32 %v1185, %v1331
      %v1337 = vadd.f32 %v1186, %v1334
      %v1338 = vld [vmem:[%s787] sm:$0x1]
      %v1340 = vperm.slane %v1338, 0
      %v1342 = vadd.f32 %v1336, %v1340
      %v1343 = vadd.f32 %v1337, %v1340
      %1344 = vst.msk [vmem:[#allocation2] sm:$0xff] %vm850, %v1342
      %1345 = vst.msk [vmem:[#allocation2 + $0x8] sm:$0xff] %vm850, %v1343
      %p1346 = scmp.eq.s32.totalorder %s35, 1
      // Predicated region
      $region101: #{encoder_forward.1} parent=95 // pred_check
        %p1347 = pneg %p1346
      $region102: #{encoder_forward.1} parent=95 // pred_check_branch
        %1349 = sbr.rel (%p1347) target = $region104
      $region103: #{encoder_forward.1} parent=95 // pred_region
        %v1350 = vld [vmem:[%s15] sm:$0x1]
        %v1351 = vld [vmem:[%s16] sm:$0x1]
        %v1352 = vsel %vm850, %v1342, 0.0
        %1353 = vadd.xlane.f32.xlu0 %v1352
        %v1354 = vpop.xlane.xlu0 %1353
        %v1355 = vsel %vm850, %v1343, 0.0
        %1356 = vadd.xlane.f32.xlu0 %v1355
        %v1357 = vpop.xlane.xlu0 %1356
        %v1358 = vmul.f32 %v1354, %v863
        %v1359 = vmul.f32 %v1357, %v863
        %v1360 = vsub.f32 %v1342, %v1358
        %v1361 = vsub.f32 %v1343, %v1359
        %v1362 = vmul.f32 %v1360, %v1360
        %v1363 = vmul.f32 %v1361, %v1361
        %v1364 = vsel %vm850, %v1362, 0.0
        %1365 = vadd.xlane.f32.xlu0 %v1364
        %v1366 = vpop.xlane.xlu0 %1365
        %v1367 = vsel %vm850, %v1363, 0.0
        %1368 = vadd.xlane.f32.xlu0 %v1367
        %v1369 = vpop.xlane.xlu0 %1368
        %v1370 = vmul.f32 %v1366, %v863
        %v1371 = vmul.f32 %v1369, %v863
        %v1372 = vadd.f32 %v1370, 1e-05
        %v1373 = vadd.f32 %v1371, 1e-05
        %v1374 = vrsqrt.pop %v1372
        %v1375 = vmul.f32 %v1374, %v1372
        %v1376 = vmul.f32 %v1375, %v1374
        %v1377 = vmul.f32 0.5, %v1376
        %v1378 = vsub.f32 1.5, %v1377
        %v1379 = vmul.f32 %v1374, %v1378
        %vm1380 = vweird.f32 %v1372
        %vm1381 = vweird.f32 %v1374
        %vm1382 = vmor %vm1380, %vm1381
        %v1383 = vsel %vm1382, %v1374, %v1379
        %v1384 = vrsqrt.pop %v1373
        %v1385 = vmul.f32 %v1384, %v1373
        %v1386 = vmul.f32 %v1385, %v1384
        %v1387 = vmul.f32 0.5, %v1386
        %v1388 = vsub.f32 1.5, %v1387
        %v1389 = vmul.f32 %v1384, %v1388
        %vm1390 = vweird.f32 %v1373
        %vm1391 = vweird.f32 %v1384
        %vm1392 = vmor %vm1390, %vm1391
        %v1393 = vsel %vm1392, %v1384, %v1389
        %v1394 = vmul.f32 %v1360, %v1383
        %v1395 = vmul.f32 %v1361, %v1393
        %v1397 = vperm.slane %v1350, 0
        %v1399 = vmul.f32 %v1394, %v1397
        %v1400 = vmul.f32 %v1395, %v1397
        %v1402 = vperm.slane %v1351, 0
        %v1404 = vadd.f32 %v1399, %v1402
        %v1405 = vadd.f32 %v1400, %v1402
        %v1406 = vld [vmem:[%s17] sm:$0xff]
        %v1407 = vld [vmem:[%s17 + $0x8] sm:$0xff]
        %v1408 = vld [vmem:[%s17 + $0x10] sm:$0xff]
        %v1409 = vld [vmem:[%s17 + $0x18] sm:$0xff]
        %v1410 = vld [vmem:[%s18] sm:$0x1]
        %v1412 = vperm.slane %v1410, 0
        %v1415 = vsel %vm850, %v1404, 0
        %v1418 = vsel %vm850, %v1405, 0
        %1420 = vmatpush.msra.mxu0 0.0
        %1421 = vmatpush.msra.mxu0 0.0
        %1422 = vmatpush.msra.mxu0 0.0
        %1423 = vmatpush.msra.mxu0 0.0
        %1424 = vmatpush.msra.mxu0 0.0
        %1425 = vmatpush.msra.mxu0 0.0
        %1426 = vmatpush.msra.mxu0 0.0
        %1427 = vmatpush.msra.mxu0 0.0
        %1428 = vmatpush.msra.mxu0 0.0
        %1429 = vmatpush.msra.mxu0 0.0
        %1430 = vmatpush.msra.mxu0 0.0
        %1431 = vmatpush.msra.mxu0 0.0
        %1432 = vmatpush.msra.mxu0 %v1409
        %1433 = vmatpush.msra.mxu0 %v1408
        %1434 = vmatpush.msra.mxu0 %v1407
        %1435 = vmatpush.msra.mxu0 %v1406
        %1436 = vmatmul.f32.gmra.mxu0 %v1415
        %v1437 = vpop.f32.mrf.mxu0
        %v1438 = vadd.f32 %v1412, %v1437
        %1439 = vmatmul.f32.gmra.mxu0 %v1418
        %v1440 = vpop.f32.mrf.mxu0
        %v1441 = vadd.f32 %v1412, %v1440
        %1442 = vdwg.mxu0
        %vm1443 = vcmask 392192
        %1444 = vst.msk [vmem:[%s792] sm:$0xff] %vm1443, %v1438
        %1445 = vst.msk [vmem:[%s792 + $0x8] sm:$0xff] %vm1443, %v1441
      $region104: #{encoder_forward.1} parent=95 // pred_fallthru
        _
      %p1446 = scmp.lt.s32.totalorder %s34, 1
      %s1447 = scalar_select %p1446, %s34, 1
      %s1448 = smul.addr %s1447, 2
      %s1449 = smul.addr %s1448, 8
      %s1450 = scalar_lea.vmem %s19, %s1449
      // Predicated region
      $region105: #{encoder_forward.1} parent=95 // pred_check
        %p1451 = pneg %p519
      $region106: #{encoder_forward.1} parent=95 // pred_check_branch
        %1453 = sbr.rel (%p1451) target = $region108
      $region107: #{encoder_forward.1} parent=95 // pred_region
        _
      $region108: #{encoder_forward.1} parent=95 // pred_fallthru
        _
    $region96: #{encoder_forward.1} parent=5 // pred_fallthru
      _
    %p1454 = scmp.le.s32.totalorder 2, %s25
    // Predicated region
    $region109: #{encoder_forward.1} parent=5 // pred_check
      %p1455 = pneg %p1454
    $region110: #{encoder_forward.1} parent=5 // pred_check_branch
      %1457 = sbr.rel (%p1455) target = $region112
    $region111: #{encoder_forward.1} parent=5 // pred_region
      %s1458 = ssub.s32 %s25, 2
      // Predicated region
      $region113: #{encoder_forward.1} parent=111 // pred_check
        %p1459 = pneg %p525
      $region114: #{encoder_forward.1} parent=111 // pred_check_branch
        %1461 = sbr.rel (%p1459) target = $region116
      $region115: #{encoder_forward.1} parent=111 // pred_region
        %p1462 = scmp.lt.s32.totalorder %s36, 1
        %s1463 = scalar_select %p1462, %s36, 1
        %s1464 = smul.addr %s1463, 2
        %s1465 = smul.addr %s1464, 8
        %s1466 = scalar_lea.vmem %s19, %s1465
      $region116: #{encoder_forward.1} parent=111 // pred_fallthru
        _
    $region112: #{encoder_forward.1} parent=5 // pred_fallthru
      _
  $region6: #{encoder_forward.1} parent=0 // loop_footer
    %s29 = sadd.s32 1, %s25
  $region7: #{encoder_forward.1} parent=0 // loop_footer_branch
    %24 = sbr.rel target = $region3
  $region8: #{encoder_forward.1} parent=0 // loop_exit
    _

</llo_original>
